<compile_context>
chip_gen: v7x
topology: tpu7x:2x2x1
jax: 0.10.0
libtpu: 0.0.40
codegen_flags: <defaults>
</compile_context>

<pallas_src>
import math
import numpy as np
import jax
import jax.numpy as jnp
from jax.experimental import pallas as pl
from jax.experimental.pallas import tpu as pltpu

EPS = 1e-5        # PyTorch GroupNorm default eps
_MXU_MIN_K = 64   # below this contraction size, use VPU broadcast-MAC instead of MXU


def _sigmoid(x):
    # exp goes to the EUP slot; exact formula keeps numerics within test tolerance.
    return 1.0 / (1.0 + jnp.exp(-x))


def _gn_affine(y, gamma, beta, relu6):
    # GroupNorm(num_groups=1): normalize over ALL (C, L) elements of this sample,
    # then per-channel affine; optional ReLU6.  Single-pass statistics; affine folded
    # into the normalization scale/shift so the tile sees one multiply-add pass.
    n = y.shape[0] * y.shape[1]
    s1 = jnp.sum(y)
    s2 = jnp.sum(y * y)
    mean = s1 / n
    var = jnp.maximum(s2 / n - mean * mean, 0.0)
    scale = gamma * jax.lax.rsqrt(var + EPS)     # (C, 1), broadcast over lanes
    shift = beta - mean * scale                  # (C, 1)
    y = y * scale + shift
    if relu6:
        y = jnp.clip(y, 0.0, 6.0)
    return y


def _dwconv1d(p, w, k, lane):
    # Depthwise Conv1d, stride=1, padding=k//2 (cross-correlation, like PyTorch).
    # Shifted taps via pltpu.roll (XLU slot) + a shared (1, L) iota mask for the
    # zero-padded edges -> no (C, L + 2*pad) concatenation, no unaligned slices.
    C, L = p.shape
    pad = k // 2
    acc = p * w[:, pad:pad + 1]                  # center tap (d == 0)
    if k == 1:
        return acc
    for j in range(k):
        d = j - pad                              # out[l] += w[j] * p[l + d]
        if d == 0:
            continue
        rolled = pltpu.roll(p, shift=(-d) % L, axis=1)   # rolled[l] = p[(l + d) % L]
        valid = (lane < (L - d)) if d > 0 else (lane >= -d)   # (1, L), broadcasts
        acc = acc + jnp.where(valid, rolled, 0.0) * w[:, j:j + 1]
    return acc


def _matvec(w, x):
    # (O, K) @ (K, L).  For tiny K the MXU systolic array is >95% idle and
    # fill/drain-latency bound, so use VPU broadcast-MACs instead.
    K = w.shape[1]
    if K >= _MXU_MIN_K:
        return jnp.dot(w, x, preferred_element_type=jnp.float32)
    acc = w[:, 0:1] * x[0:1, :]
    for kk in range(1, K):
        acc = acc + w[:, kk:kk + 1] * x[kk:kk + 1, :]
    return acc


def _matvec2(wa, wb, x):
    # Fused pair of channel matmuls sharing the same contraction input x.
    K = x.shape[0]
    if K >= _MXU_MIN_K:
        return (jnp.dot(wa, x, preferred_element_type=jnp.float32),
                jnp.dot(wb, x, preferred_element_type=jnp.float32))
    xr = x[0:1, :]
    a = wa[:, 0:1] * xr
    b = wb[:, 0:1] * xr
    for kk in range(1, K):
        xr = x[kk:kk + 1, :]
        a = a + wa[:, kk:kk + 1] * xr
        b = b + wb[:, kk:kk + 1] * xr
    return a, b


def emcad_stage_kernel(x_ref,
                       wfc1_ref, wfc2_ref,          # CAB
                       wsab_ref,                    # SAB
                       w1_ref, g1_ref, b1_ref,      # MSCB pconv1
                       wd1_ref, gd1_ref, bd1_ref,   # MSDC k=1
                       wd3_ref, gd3_ref, bd3_ref,   # MSDC k=3
                       wd5_ref, gd5_ref, bd5_ref,   # MSDC k=5
                       w2_ref, g2_ref, b2_ref,      # MSCB pconv2 (shuffle-folded)
                       wskip_ref,                   # skip 1x1 projection
                       out_ref):
    x = x_ref[...]                                               # (C_in, L)
    L = x.shape[1]
    lane = jax.lax.broadcasted_iota(jnp.int32, (1, L), 1)        # hoisted edge mask

    # ---- CAB: channel attention ------------------------------------------------
    # Reference module uses AdaptiveAvgPool1d for both pooling branches, so the two
    # branches are identical -> factor of 2 before the sigmoid.
    mean_x = jnp.mean(x, axis=1, keepdims=True)                  # (C_in, 1)
    h = jnp.maximum(_matvec(wfc1_ref[...], mean_x), 0.0)         # (red, 1), ReLU
    ca = _sigmoid(2.0 * _matvec(wfc2_ref[...], h))               # (C_in, 1)
    d = ca * x                                                   # (C_in, L)

    # ---- SAB: spatial attention (conv1d k=7 over [mean_C; max_C]) ---------------
    avg_c = jnp.mean(d, axis=0, keepdims=True)                   # (1, L)
    max_c = jnp.max(d, axis=0, keepdims=True)                    # (1, L)
    wsab = wsab_ref[...]                                         # (2, 7)
    s = (_dwconv1d(avg_c, wsab[0:1, :], 7, lane)
         + _dwconv1d(max_c, wsab[1:2, :], 7, lane))              # (1, L)
    d = _sigmoid(s) * d                                          # (C_in, L)

    # ---- MSCB --------------------------------------------------------------------
    # pconv1 (1x1 conv) and skip 1x1 projection fused over the shared K=C_in contraction.
    p, xs = _matvec2(w1_ref[...], wskip_ref[...], d)             # (C_ex, L), (C_out, L)
    p = _gn_affine(p, g1_ref[...], b1_ref[...], relu6=True)

    # MSDC (dw_parallel=True): depthwise convs k=1,3,5, each GN(1)+ReLU6, summed (add=True).
    dout = _gn_affine(_dwconv1d(p, wd1_ref[...], 1, lane), gd1_ref[...], bd1_ref[...], True)
    dout = dout + _gn_affine(_dwconv1d(p, wd3_ref[...], 3, lane), gd3_ref[...], bd3_ref[...], True)
    dout = dout + _gn_affine(_dwconv1d(p, wd5_ref[...], 5, lane), gd5_ref[...], bd5_ref[...], True)

    # channel_shuffle is a static channel permutation; folded (exactly) into the columns
    # of w2 in the wrapper, so pconv2 here is a plain channel matmul + GroupNorm(1).
    o = _matvec(w2_ref[...], dout)
    o = _gn_affine(o, g2_ref[...], b2_ref[...], relu6=False)

    # skip connection (stride==1): residual add of the projected input.
    out_ref[...] = xs + o


def shuffle_src_indices(channels, groups):
    # channel_shuffle: output channel n reads input channel src[n]
    return np.arange(channels).reshape(groups, channels // groups).T.reshape(-1)


def make_params(key, c_in, c_out, expansion=6, kernel_sizes=(1, 3, 5), cab_ratio=16):
    # 'normal' init scheme: conv weights ~ N(0, 0.02), GroupNorm gamma=1 / beta=0.
    c_ex = c_in * expansion
    ratio = c_in if c_in < cab_ratio else cab_ratio
    red = max(1, c_in // ratio)
    keys = jax.random.split(key, 12)
    p = {
        'wfc1': jax.random.normal(keys[6], (red, c_in), jnp.float32) * 0.02,
        'wfc2': jax.random.normal(keys[7], (c_in, red), jnp.float32) * 0.02,
        'wsab': jax.random.normal(keys[8], (2, 7), jnp.float32) * 0.02,
        'w1': jax.random.normal(keys[0], (c_ex, c_in), jnp.float32) * 0.02,
        'g1': jnp.ones((c_ex, 1), jnp.float32),
        'b1': jnp.zeros((c_ex, 1), jnp.float32),
        'w2': jax.random.normal(keys[4], (c_out, c_ex), jnp.float32) * 0.02,
        'g2': jnp.ones((c_out, 1), jnp.float32),
        'b2': jnp.zeros((c_out, 1), jnp.float32),
        'wskip': jax.random.normal(keys[5], (c_out, c_in), jnp.float32) * 0.02,
    }
    for i, k in enumerate(kernel_sizes):
        p[f'wd{k}'] = jax.random.normal(keys[1 + i], (c_ex, k), jnp.float32) * 0.02
        p[f'gd{k}'] = jnp.ones((c_ex, 1), jnp.float32)
        p[f'bd{k}'] = jnp.zeros((c_ex, 1), jnp.float32)
    return p


def emcad_stage_pallas(x, params, c_out):
    B, C_in, L = x.shape
    c_ex = params['w1'].shape[0]
    red = params['wfc1'].shape[0]

    # Fold channel_shuffle (a static permutation) into pconv2's input-channel axis.
    g = math.gcd(c_ex, c_out)              # combined_channels == c_ex since add=True
    src = shuffle_src_indices(c_ex, g)
    w2_eff = params['w2'][:, np.argsort(src)]

    args = (x,
            params['wfc1'], params['wfc2'],
            params['wsab'],
            params['w1'], params['g1'], params['b1'],
            params['wd1'], params['gd1'], params['bd1'],
            params['wd3'], params['gd3'], params['bd3'],
            params['wd5'], params['gd5'], params['bd5'],
            w2_eff, params['g2'], params['b2'],
            params['wskip'])

    def fullspec(a):
        nd = a.ndim
        return pl.BlockSpec(a.shape, lambda b, _nd=nd: (0,) * _nd)

    in_specs = [pl.BlockSpec((pl.Squeezed(), C_in, L), lambda b: (b, 0, 0))] + \
               [fullspec(a) for a in args[1:]]

    # Explicit VMEM budget: double-buffered I/O blocks + live (c_ex, L) intermediates
    # + weights, with 2x safety margin; capped at v7x's 64 MiB physical VMEM so an
    # overflow surfaces at compile time instead of silently spilling.
    est = 4 * (2 * (C_in + c_out) * L              # double-buffered in/out blocks
               + 8 * c_ex * L + 2 * c_out * L      # p, dout, conv temps, o, xs
               + C_in * L + 6 * L                  # d, attention rows/masks
               + 2 * (c_ex * C_in + c_out * c_ex + c_out * C_in
                      + 2 * red * C_in + 14
                      + 15 * c_ex + 4 * c_out))    # weights (double-buffered)
    vmem_limit = int(min(64 * 1024 * 1024, max(8 * 1024 * 1024, 2 * est)))

    return pl.pallas_call(
        emcad_stage_kernel,
        out_shape=jax.ShapeDtypeStruct((B, c_out, L), jnp.float32),
        grid_spec=pltpu.PrefetchScalarGridSpec(
            num_scalar_prefetch=0,
            grid=(B,),
            in_specs=in_specs,
            out_specs=pl.BlockSpec((pl.Squeezed(), c_out, L), lambda b: (b, 0, 0)),
        ),
        compiler_params=pltpu.CompilerParams(
            dimension_semantics=("parallel",),      # per-sample work is independent
            vmem_limit_bytes=vmem_limit),
    )(*args)


def emcad_stage_ref(x, params, c_out):
    # Independent pure-JAX reference (lax.conv + explicit channel shuffle).
    def gn(y, gamma, beta):
        mean = y.mean(axis=(1, 2), keepdims=True)
        var = ((y - mean) ** 2).mean(axis=(1, 2), keepdims=True)
        return (y - mean) / jnp.sqrt(var + EPS) * gamma[None, :, :] + beta[None, :, :]

    # CAB (both pooling branches are AdaptiveAvgPool1d in the reference module).
    mean_x = x.mean(axis=2, keepdims=True)                               # (B, C, 1)
    h = jnp.maximum(jnp.einsum('rc,bcl->brl', params['wfc1'], mean_x), 0.0)
    ca = jax.nn.sigmoid(2.0 * jnp.einsum('or,brl->bol', params['wfc2'], h))
    d = ca * x

    # SAB
    avg_c = d.mean(axis=1, keepdims=True)
    max_c = d.max(axis=1, keepdims=True)
    sp = jnp.concatenate([avg_c, max_c], axis=1)                         # (B, 2, L)
    s = jax.lax.conv_general_dilated(
        sp, params['wsab'].reshape(1, 2, 7), window_strides=(1,), padding=[(3, 3)],
        dimension_numbers=('NCH', 'OIH', 'NCH'))
    d = jax.nn.sigmoid(s) * d

    # MSCB
    c_ex = params['w1'].shape[0]
    p = jnp.einsum('oc,bcl->bol', params['w1'], d)
    p = jnp.clip(gn(p, params['g1'], params['b1']), 0.0, 6.0)
    dout = 0.0
    for k in (1, 3, 5):
        wd = params[f'wd{k}'].reshape(c_ex, 1, k)
        dd = jax.lax.conv_general_dilated(
            p, wd, window_strides=(1,), padding=[(k // 2, k // 2)],
            dimension_numbers=('NCH', 'OIH', 'NCH'), feature_group_count=c_ex)
        dout = dout + jnp.clip(gn(dd, params[f'gd{k}'], params[f'bd{k}']), 0.0, 6.0)
    g = math.gcd(c_ex, c_out)
    dout = dout[:, shuffle_src_indices(c_ex, g), :]
    o = gn(jnp.einsum('oc,bcl->bol', params['w2'], dout), params['g2'], params['b2'])
    xs = jnp.einsum('oc,bcl->bol', params['wskip'], d)
    return xs + o


if __name__ == "__main__":
    B, C_in, C_out, L = 2, 4, 12, 128
    key = jax.random.PRNGKey(0)
    kx, kp = jax.random.split(key)
    x = jax.random.normal(kx, (B, C_in, L), jnp.float32)
    params = make_params(kp, C_in, C_out, expansion=6)

    out = emcad_stage_pallas(x, params, C_out)
    jax.block_until_ready(out)

    ref = emcad_stage_ref(x, params, C_out)
    np.testing.assert_allclose(np.asarray(out), np.asarray(ref), rtol=1e-4, atol=1e-4)
    print("KERNEL_OK")
</pallas_src>

<mosaic_0001>
module attributes {stable_mosaic.version = 11 : i64} {
  func.func @emcad_stage_kernel(%arg0: i32, %arg1: memref<1x4x128xf32, #tpu.memory_space<vmem>>, %arg2: memref<1x4xf32, #tpu.memory_space<vmem>>, %arg3: memref<4x1xf32, #tpu.memory_space<vmem>>, %arg4: memref<2x7xf32, #tpu.memory_space<vmem>>, %arg5: memref<24x4xf32, #tpu.memory_space<vmem>>, %arg6: memref<24x1xf32, #tpu.memory_space<vmem>>, %arg7: memref<24x1xf32, #tpu.memory_space<vmem>>, %arg8: memref<24x1xf32, #tpu.memory_space<vmem>>, %arg9: memref<24x1xf32, #tpu.memory_space<vmem>>, %arg10: memref<24x1xf32, #tpu.memory_space<vmem>>, %arg11: memref<24x3xf32, #tpu.memory_space<vmem>>, %arg12: memref<24x1xf32, #tpu.memory_space<vmem>>, %arg13: memref<24x1xf32, #tpu.memory_space<vmem>>, %arg14: memref<24x5xf32, #tpu.memory_space<vmem>>, %arg15: memref<24x1xf32, #tpu.memory_space<vmem>>, %arg16: memref<24x1xf32, #tpu.memory_space<vmem>>, %arg17: memref<12x24xf32, #tpu.memory_space<vmem>>, %arg18: memref<12x1xf32, #tpu.memory_space<vmem>>, %arg19: memref<12x1xf32, #tpu.memory_space<vmem>>, %arg20: memref<12x4xf32, #tpu.memory_space<vmem>>, %arg21: memref<1x12x128xf32, #tpu.memory_space<vmem>>) attributes {dimension_semantics = [#tpu.dimension_semantics<parallel>], iteration_bounds = array<i64: 2>, scalar_prefetch = 0 : i64, scratch_operands = 0 : i64, tpu.core_type = #tpu.core_type<tc>, window_params = [{transform_indices = @transform_0, window_bounds = array<i64: 1, 4, 128>}, {pipeline_mode = #tpu.pipeline_mode<synchronous>, transform_indices = @transform_1, window_bounds = array<i64: 1, 4>}, {pipeline_mode = #tpu.pipeline_mode<synchronous>, transform_indices = @transform_2, window_bounds = array<i64: 4, 1>}, {pipeline_mode = #tpu.pipeline_mode<synchronous>, transform_indices = @transform_3, window_bounds = array<i64: 2, 7>}, {pipeline_mode = #tpu.pipeline_mode<synchronous>, transform_indices = @transform_4, window_bounds = array<i64: 24, 4>}, {pipeline_mode = #tpu.pipeline_mode<synchronous>, transform_indices = @transform_5, window_bounds = array<i64: 24, 1>}, {pipeline_mode = #tpu.pipeline_mode<synchronous>, transform_indices = @transform_6, window_bounds = array<i64: 24, 1>}, {pipeline_mode = #tpu.pipeline_mode<synchronous>, transform_indices = @transform_7, window_bounds = array<i64: 24, 1>}, {pipeline_mode = #tpu.pipeline_mode<synchronous>, transform_indices = @transform_8, window_bounds = array<i64: 24, 1>}, {pipeline_mode = #tpu.pipeline_mode<synchronous>, transform_indices = @transform_9, window_bounds = array<i64: 24, 1>}, {pipeline_mode = #tpu.pipeline_mode<synchronous>, transform_indices = @transform_10, window_bounds = array<i64: 24, 3>}, {pipeline_mode = #tpu.pipeline_mode<synchronous>, transform_indices = @transform_11, window_bounds = array<i64: 24, 1>}, {pipeline_mode = #tpu.pipeline_mode<synchronous>, transform_indices = @transform_12, window_bounds = array<i64: 24, 1>}, {pipeline_mode = #tpu.pipeline_mode<synchronous>, transform_indices = @transform_13, window_bounds = array<i64: 24, 5>}, {pipeline_mode = #tpu.pipeline_mode<synchronous>, transform_indices = @transform_14, window_bounds = array<i64: 24, 1>}, {pipeline_mode = #tpu.pipeline_mode<synchronous>, transform_indices = @transform_15, window_bounds = array<i64: 24, 1>}, {pipeline_mode = #tpu.pipeline_mode<synchronous>, transform_indices = @transform_16, window_bounds = array<i64: 12, 24>}, {pipeline_mode = #tpu.pipeline_mode<synchronous>, transform_indices = @transform_17, window_bounds = array<i64: 12, 1>}, {pipeline_mode = #tpu.pipeline_mode<synchronous>, transform_indices = @transform_18, window_bounds = array<i64: 12, 1>}, {pipeline_mode = #tpu.pipeline_mode<synchronous>, transform_indices = @transform_19, window_bounds = array<i64: 12, 4>}, {transform_indices = @transform_20, window_bounds = array<i64: 1, 12, 128>}]} {
    %c0 = arith.constant 0 : index
    %c0_0 = arith.constant 0 : index
    %c0_1 = arith.constant 0 : index
    %0 = vector.load %arg1[%c0, %c0_0, %c0_1] : memref<1x4x128xf32, #tpu.memory_space<vmem>>, vector<1x4x128xf32>
    %1 = vector.shape_cast %0 : vector<1x4x128xf32> to vector<4x128xf32>
    %2 = tpu.iota {dimensions = array<i32: 1>} : vector<1x128xi32>
    %cst = arith.constant dense<0.000000e+00> : vector<4xf32>
    %3 = vector.multi_reduction <add>, %1, %cst [1] : vector<4x128xf32> to vector<4xf32>
    %4 = vector.shape_cast %3 : vector<4xf32> to vector<4x1xf32>
    %cst_2 = arith.constant 1.280000e+02 : f32
    %5 = vector.broadcast %cst_2 : f32 to vector<4x1xf32>
    %6 = arith.divf %4, %5 : vector<4x1xf32>
    %c0_3 = arith.constant 0 : index
    %c0_4 = arith.constant 0 : index
    %7 = vector.load %arg2[%c0_3, %c0_4] : memref<1x4xf32, #tpu.memory_space<vmem>>, vector<1x4xf32>
    %8 = vector.extract_strided_slice %7 {offsets = [0, 0], sizes = [1, 1], strides = [1, 1]} : vector<1x4xf32> to vector<1x1xf32>
    %9 = vector.extract_strided_slice %6 {offsets = [0, 0], sizes = [1, 1], strides = [1, 1]} : vector<4x1xf32> to vector<1x1xf32>
    %10 = arith.mulf %8, %9 : vector<1x1xf32>
    %11 = vector.extract_strided_slice %7 {offsets = [0, 1], sizes = [1, 1], strides = [1, 1]} : vector<1x4xf32> to vector<1x1xf32>
    %12 = vector.extract_strided_slice %6 {offsets = [1, 0], sizes = [1, 1], strides = [1, 1]} : vector<4x1xf32> to vector<1x1xf32>
    %13 = arith.mulf %11, %12 : vector<1x1xf32>
    %14 = arith.addf %10, %13 : vector<1x1xf32>
    %15 = vector.extract_strided_slice %7 {offsets = [0, 2], sizes = [1, 1], strides = [1, 1]} : vector<1x4xf32> to vector<1x1xf32>
    %16 = vector.extract_strided_slice %6 {offsets = [2, 0], sizes = [1, 1], strides = [1, 1]} : vector<4x1xf32> to vector<1x1xf32>
    %17 = arith.mulf %15, %16 : vector<1x1xf32>
    %18 = arith.addf %14, %17 : vector<1x1xf32>
    %19 = vector.extract_strided_slice %7 {offsets = [0, 3], sizes = [1, 1], strides = [1, 1]} : vector<1x4xf32> to vector<1x1xf32>
    %20 = vector.extract_strided_slice %6 {offsets = [3, 0], sizes = [1, 1], strides = [1, 1]} : vector<4x1xf32> to vector<1x1xf32>
    %21 = arith.mulf %19, %20 : vector<1x1xf32>
    %22 = arith.addf %18, %21 : vector<1x1xf32>
    %cst_5 = arith.constant 0.000000e+00 : f32
    %23 = vector.broadcast %cst_5 : f32 to vector<1x1xf32>
    %24 = arith.maximumf %22, %23 : vector<1x1xf32>
    %c0_6 = arith.constant 0 : index
    %c0_7 = arith.constant 0 : index
    %25 = vector.load %arg3[%c0_6, %c0_7] : memref<4x1xf32, #tpu.memory_space<vmem>>, vector<4x1xf32>
    %26 = vector.broadcast %24 : vector<1x1xf32> to vector<4x1xf32>
    %27 = arith.mulf %25, %26 : vector<4x1xf32>
    %cst_8 = arith.constant 2.000000e+00 : f32
    %28 = vector.broadcast %cst_8 : f32 to vector<4x1xf32>
    %29 = arith.mulf %28, %27 : vector<4x1xf32>
    %cst_9 = arith.constant 0.000000e+00 : f32
    %30 = vector.broadcast %cst_9 : f32 to vector<4x1xf32>
    %31 = arith.subf %30, %29 : vector<4x1xf32>
    %32 = math.exp %31 : vector<4x1xf32>
    %cst_10 = arith.constant 1.000000e+00 : f32
    %33 = vector.broadcast %cst_10 : f32 to vector<4x1xf32>
    %34 = arith.addf %33, %32 : vector<4x1xf32>
    %cst_11 = arith.constant 1.000000e+00 : f32
    %35 = vector.broadcast %cst_11 : f32 to vector<4x1xf32>
    %36 = arith.divf %35, %34 : vector<4x1xf32>
    %37 = vector.broadcast %36 : vector<4x1xf32> to vector<4x128xf32>
    %38 = arith.mulf %37, %1 : vector<4x128xf32>
    %cst_12 = arith.constant dense<0.000000e+00> : vector<128xf32>
    %39 = vector.multi_reduction <add>, %38, %cst_12 [0] : vector<4x128xf32> to vector<128xf32>
    %40 = vector.shape_cast %39 : vector<128xf32> to vector<1x128xf32>
    %cst_13 = arith.constant 4.000000e+00 : f32
    %41 = vector.broadcast %cst_13 : f32 to vector<1x128xf32>
    %42 = arith.divf %40, %41 : vector<1x128xf32>
    %cst_14 = arith.constant dense<0xFF800000> : vector<128xf32>
    %43 = vector.multi_reduction <maximumf>, %38, %cst_14 [0] : vector<4x128xf32> to vector<128xf32>
    %44 = vector.shape_cast %43 : vector<128xf32> to vector<1x128xf32>
    %c0_15 = arith.constant 0 : index
    %c0_16 = arith.constant 0 : index
    %45 = vector.load %arg4[%c0_15, %c0_16] : memref<2x7xf32, #tpu.memory_space<vmem>>, vector<2x7xf32>
    %46 = vector.extract_strided_slice %45 {offsets = [0, 0], sizes = [1, 7], strides = [1, 1]} : vector<2x7xf32> to vector<1x7xf32>
    %47 = vector.extract_strided_slice %46 {offsets = [0, 3], sizes = [1, 1], strides = [1, 1]} : vector<1x7xf32> to vector<1x1xf32>
    %48 = vector.broadcast %47 : vector<1x1xf32> to vector<1x128xf32>
    %49 = arith.mulf %42, %48 : vector<1x128xf32>
    %c3_i32 = arith.constant 3 : i32
    %50 = tpu.dynamic_rotate %42 by %c3_i32 dim 1 : vector<1x128xf32>, i32 -> vector<1x128xf32>
    %c3_i32_17 = arith.constant 3 : i32
    %51 = vector.broadcast %c3_i32_17 : i32 to vector<1x128xi32>
    %52 = arith.cmpi sge, %2, %51 : vector<1x128xi32>
    %cst_18 = arith.constant 0.000000e+00 : f32
    %53 = vector.broadcast %cst_18 : f32 to vector<1x128xf32>
    %54 = arith.select %52, %50, %53 : vector<1x128xi1>, vector<1x128xf32>
    %55 = vector.extract_strided_slice %46 {offsets = [0, 0], sizes = [1, 1], strides = [1, 1]} : vector<1x7xf32> to vector<1x1xf32>
    %56 = vector.broadcast %55 : vector<1x1xf32> to vector<1x128xf32>
    %57 = arith.mulf %54, %56 : vector<1x128xf32>
    %58 = arith.addf %49, %57 : vector<1x128xf32>
    %c2_i32 = arith.constant 2 : i32
    %59 = tpu.dynamic_rotate %42 by %c2_i32 dim 1 : vector<1x128xf32>, i32 -> vector<1x128xf32>
    %c2_i32_19 = arith.constant 2 : i32
    %60 = vector.broadcast %c2_i32_19 : i32 to vector<1x128xi32>
    %61 = arith.cmpi sge, %2, %60 : vector<1x128xi32>
    %cst_20 = arith.constant 0.000000e+00 : f32
    %62 = vector.broadcast %cst_20 : f32 to vector<1x128xf32>
    %63 = arith.select %61, %59, %62 : vector<1x128xi1>, vector<1x128xf32>
    %64 = vector.extract_strided_slice %46 {offsets = [0, 1], sizes = [1, 1], strides = [1, 1]} : vector<1x7xf32> to vector<1x1xf32>
    %65 = vector.broadcast %64 : vector<1x1xf32> to vector<1x128xf32>
    %66 = arith.mulf %63, %65 : vector<1x128xf32>
    %67 = arith.addf %58, %66 : vector<1x128xf32>
    %c1_i32 = arith.constant 1 : i32
    %68 = tpu.dynamic_rotate %42 by %c1_i32 dim 1 : vector<1x128xf32>, i32 -> vector<1x128xf32>
    %c1_i32_21 = arith.constant 1 : i32
    %69 = vector.broadcast %c1_i32_21 : i32 to vector<1x128xi32>
    %70 = arith.cmpi sge, %2, %69 : vector<1x128xi32>
    %cst_22 = arith.constant 0.000000e+00 : f32
    %71 = vector.broadcast %cst_22 : f32 to vector<1x128xf32>
    %72 = arith.select %70, %68, %71 : vector<1x128xi1>, vector<1x128xf32>
    %73 = vector.extract_strided_slice %46 {offsets = [0, 2], sizes = [1, 1], strides = [1, 1]} : vector<1x7xf32> to vector<1x1xf32>
    %74 = vector.broadcast %73 : vector<1x1xf32> to vector<1x128xf32>
    %75 = arith.mulf %72, %74 : vector<1x128xf32>
    %76 = arith.addf %67, %75 : vector<1x128xf32>
    %c127_i32 = arith.constant 127 : i32
    %77 = tpu.dynamic_rotate %42 by %c127_i32 dim 1 : vector<1x128xf32>, i32 -> vector<1x128xf32>
    %c127_i32_23 = arith.constant 127 : i32
    %78 = vector.broadcast %c127_i32_23 : i32 to vector<1x128xi32>
    %79 = arith.cmpi slt, %2, %78 : vector<1x128xi32>
    %cst_24 = arith.constant 0.000000e+00 : f32
    %80 = vector.broadcast %cst_24 : f32 to vector<1x128xf32>
    %81 = arith.select %79, %77, %80 : vector<1x128xi1>, vector<1x128xf32>
    %82 = vector.extract_strided_slice %46 {offsets = [0, 4], sizes = [1, 1], strides = [1, 1]} : vector<1x7xf32> to vector<1x1xf32>
    %83 = vector.broadcast %82 : vector<1x1xf32> to vector<1x128xf32>
    %84 = arith.mulf %81, %83 : vector<1x128xf32>
    %85 = arith.addf %76, %84 : vector<1x128xf32>
    %c126_i32 = arith.constant 126 : i32
    %86 = tpu.dynamic_rotate %42 by %c126_i32 dim 1 : vector<1x128xf32>, i32 -> vector<1x128xf32>
    %c126_i32_25 = arith.constant 126 : i32
    %87 = vector.broadcast %c126_i32_25 : i32 to vector<1x128xi32>
    %88 = arith.cmpi slt, %2, %87 : vector<1x128xi32>
    %cst_26 = arith.constant 0.000000e+00 : f32
    %89 = vector.broadcast %cst_26 : f32 to vector<1x128xf32>
    %90 = arith.select %88, %86, %89 : vector<1x128xi1>, vector<1x128xf32>
    %91 = vector.extract_strided_slice %46 {offsets = [0, 5], sizes = [1, 1], strides = [1, 1]} : vector<1x7xf32> to vector<1x1xf32>
    %92 = vector.broadcast %91 : vector<1x1xf32> to vector<1x128xf32>
    %93 = arith.mulf %90, %92 : vector<1x128xf32>
    %94 = arith.addf %85, %93 : vector<1x128xf32>
    %c125_i32 = arith.constant 125 : i32
    %95 = tpu.dynamic_rotate %42 by %c125_i32 dim 1 : vector<1x128xf32>, i32 -> vector<1x128xf32>
    %c125_i32_27 = arith.constant 125 : i32
    %96 = vector.broadcast %c125_i32_27 : i32 to vector<1x128xi32>
    %97 = arith.cmpi slt, %2, %96 : vector<1x128xi32>
    %cst_28 = arith.constant 0.000000e+00 : f32
    %98 = vector.broadcast %cst_28 : f32 to vector<1x128xf32>
    %99 = arith.select %97, %95, %98 : vector<1x128xi1>, vector<1x128xf32>
    %100 = vector.extract_strided_slice %46 {offsets = [0, 6], sizes = [1, 1], strides = [1, 1]} : vector<1x7xf32> to vector<1x1xf32>
    %101 = vector.broadcast %100 : vector<1x1xf32> to vector<1x128xf32>
    %102 = arith.mulf %99, %101 : vector<1x128xf32>
    %103 = arith.addf %94, %102 : vector<1x128xf32>
    %104 = vector.extract_strided_slice %45 {offsets = [1, 0], sizes = [1, 7], strides = [1, 1]} : vector<2x7xf32> to vector<1x7xf32>
    %105 = vector.extract_strided_slice %104 {offsets = [0, 3], sizes = [1, 1], strides = [1, 1]} : vector<1x7xf32> to vector<1x1xf32>
    %106 = vector.broadcast %105 : vector<1x1xf32> to vector<1x128xf32>
    %107 = arith.mulf %44, %106 : vector<1x128xf32>
    %c3_i32_29 = arith.constant 3 : i32
    %108 = tpu.dynamic_rotate %44 by %c3_i32_29 dim 1 : vector<1x128xf32>, i32 -> vector<1x128xf32>
    %c3_i32_30 = arith.constant 3 : i32
    %109 = vector.broadcast %c3_i32_30 : i32 to vector<1x128xi32>
    %110 = arith.cmpi sge, %2, %109 : vector<1x128xi32>
    %cst_31 = arith.constant 0.000000e+00 : f32
    %111 = vector.broadcast %cst_31 : f32 to vector<1x128xf32>
    %112 = arith.select %110, %108, %111 : vector<1x128xi1>, vector<1x128xf32>
    %113 = vector.extract_strided_slice %104 {offsets = [0, 0], sizes = [1, 1], strides = [1, 1]} : vector<1x7xf32> to vector<1x1xf32>
    %114 = vector.broadcast %113 : vector<1x1xf32> to vector<1x128xf32>
    %115 = arith.mulf %112, %114 : vector<1x128xf32>
    %116 = arith.addf %107, %115 : vector<1x128xf32>
    %c2_i32_32 = arith.constant 2 : i32
    %117 = tpu.dynamic_rotate %44 by %c2_i32_32 dim 1 : vector<1x128xf32>, i32 -> vector<1x128xf32>
    %c2_i32_33 = arith.constant 2 : i32
    %118 = vector.broadcast %c2_i32_33 : i32 to vector<1x128xi32>
    %119 = arith.cmpi sge, %2, %118 : vector<1x128xi32>
    %cst_34 = arith.constant 0.000000e+00 : f32
    %120 = vector.broadcast %cst_34 : f32 to vector<1x128xf32>
    %121 = arith.select %119, %117, %120 : vector<1x128xi1>, vector<1x128xf32>
    %122 = vector.extract_strided_slice %104 {offsets = [0, 1], sizes = [1, 1], strides = [1, 1]} : vector<1x7xf32> to vector<1x1xf32>
    %123 = vector.broadcast %122 : vector<1x1xf32> to vector<1x128xf32>
    %124 = arith.mulf %121, %123 : vector<1x128xf32>
    %125 = arith.addf %116, %124 : vector<1x128xf32>
    %c1_i32_35 = arith.constant 1 : i32
    %126 = tpu.dynamic_rotate %44 by %c1_i32_35 dim 1 : vector<1x128xf32>, i32 -> vector<1x128xf32>
    %c1_i32_36 = arith.constant 1 : i32
    %127 = vector.broadcast %c1_i32_36 : i32 to vector<1x128xi32>
    %128 = arith.cmpi sge, %2, %127 : vector<1x128xi32>
    %cst_37 = arith.constant 0.000000e+00 : f32
    %129 = vector.broadcast %cst_37 : f32 to vector<1x128xf32>
    %130 = arith.select %128, %126, %129 : vector<1x128xi1>, vector<1x128xf32>
    %131 = vector.extract_strided_slice %104 {offsets = [0, 2], sizes = [1, 1], strides = [1, 1]} : vector<1x7xf32> to vector<1x1xf32>
    %132 = vector.broadcast %131 : vector<1x1xf32> to vector<1x128xf32>
    %133 = arith.mulf %130, %132 : vector<1x128xf32>
    %134 = arith.addf %125, %133 : vector<1x128xf32>
    %c127_i32_38 = arith.constant 127 : i32
    %135 = tpu.dynamic_rotate %44 by %c127_i32_38 dim 1 : vector<1x128xf32>, i32 -> vector<1x128xf32>
    %c127_i32_39 = arith.constant 127 : i32
    %136 = vector.broadcast %c127_i32_39 : i32 to vector<1x128xi32>
    %137 = arith.cmpi slt, %2, %136 : vector<1x128xi32>
    %cst_40 = arith.constant 0.000000e+00 : f32
    %138 = vector.broadcast %cst_40 : f32 to vector<1x128xf32>
    %139 = arith.select %137, %135, %138 : vector<1x128xi1>, vector<1x128xf32>
    %140 = vector.extract_strided_slice %104 {offsets = [0, 4], sizes = [1, 1], strides = [1, 1]} : vector<1x7xf32> to vector<1x1xf32>
    %141 = vector.broadcast %140 : vector<1x1xf32> to vector<1x128xf32>
    %142 = arith.mulf %139, %141 : vector<1x128xf32>
    %143 = arith.addf %134, %142 : vector<1x128xf32>
    %c126_i32_41 = arith.constant 126 : i32
    %144 = tpu.dynamic_rotate %44 by %c126_i32_41 dim 1 : vector<1x128xf32>, i32 -> vector<1x128xf32>
    %c126_i32_42 = arith.constant 126 : i32
    %145 = vector.broadcast %c126_i32_42 : i32 to vector<1x128xi32>
    %146 = arith.cmpi slt, %2, %145 : vector<1x128xi32>
    %cst_43 = arith.constant 0.000000e+00 : f32
    %147 = vector.broadcast %cst_43 : f32 to vector<1x128xf32>
    %148 = arith.select %146, %144, %147 : vector<1x128xi1>, vector<1x128xf32>
    %149 = vector.extract_strided_slice %104 {offsets = [0, 5], sizes = [1, 1], strides = [1, 1]} : vector<1x7xf32> to vector<1x1xf32>
    %150 = vector.broadcast %149 : vector<1x1xf32> to vector<1x128xf32>
    %151 = arith.mulf %148, %150 : vector<1x128xf32>
    %152 = arith.addf %143, %151 : vector<1x128xf32>
    %c125_i32_44 = arith.constant 125 : i32
    %153 = tpu.dynamic_rotate %44 by %c125_i32_44 dim 1 : vector<1x128xf32>, i32 -> vector<1x128xf32>
    %c125_i32_45 = arith.constant 125 : i32
    %154 = vector.broadcast %c125_i32_45 : i32 to vector<1x128xi32>
    %155 = arith.cmpi slt, %2, %154 : vector<1x128xi32>
    %cst_46 = arith.constant 0.000000e+00 : f32
    %156 = vector.broadcast %cst_46 : f32 to vector<1x128xf32>
    %157 = arith.select %155, %153, %156 : vector<1x128xi1>, vector<1x128xf32>
    %158 = vector.extract_strided_slice %104 {offsets = [0, 6], sizes = [1, 1], strides = [1, 1]} : vector<1x7xf32> to vector<1x1xf32>
    %159 = vector.broadcast %158 : vector<1x1xf32> to vector<1x128xf32>
    %160 = arith.mulf %157, %159 : vector<1x128xf32>
    %161 = arith.addf %152, %160 : vector<1x128xf32>
    %162 = arith.addf %103, %161 : vector<1x128xf32>
    %cst_47 = arith.constant 0.000000e+00 : f32
    %163 = vector.broadcast %cst_47 : f32 to vector<1x128xf32>
    %164 = arith.subf %163, %162 : vector<1x128xf32>
    %165 = math.exp %164 : vector<1x128xf32>
    %cst_48 = arith.constant 1.000000e+00 : f32
    %166 = vector.broadcast %cst_48 : f32 to vector<1x128xf32>
    %167 = arith.addf %166, %165 : vector<1x128xf32>
    %cst_49 = arith.constant 1.000000e+00 : f32
    %168 = vector.broadcast %cst_49 : f32 to vector<1x128xf32>
    %169 = arith.divf %168, %167 : vector<1x128xf32>
    %170 = vector.broadcast %169 : vector<1x128xf32> to vector<4x128xf32>
    %171 = arith.mulf %170, %38 : vector<4x128xf32>
    %c0_50 = arith.constant 0 : index
    %c0_51 = arith.constant 0 : index
    %172 = vector.load %arg5[%c0_50, %c0_51] : memref<24x4xf32, #tpu.memory_space<vmem>>, vector<24x4xf32>
    %c0_52 = arith.constant 0 : index
    %c0_53 = arith.constant 0 : index
    %173 = vector.load %arg20[%c0_52, %c0_53] : memref<12x4xf32, #tpu.memory_space<vmem>>, vector<12x4xf32>
    %174 = vector.extract_strided_slice %171 {offsets = [0, 0], sizes = [1, 128], strides = [1, 1]} : vector<4x128xf32> to vector<1x128xf32>
    %175 = vector.extract_strided_slice %172 {offsets = [0, 0], sizes = [24, 1], strides = [1, 1]} : vector<24x4xf32> to vector<24x1xf32>
    %176 = vector.broadcast %175 : vector<24x1xf32> to vector<24x128xf32>
    %177 = vector.broadcast %174 : vector<1x128xf32> to vector<24x128xf32>
    %178 = arith.mulf %176, %177 : vector<24x128xf32>
    %179 = vector.extract_strided_slice %173 {offsets = [0, 0], sizes = [12, 1], strides = [1, 1]} : vector<12x4xf32> to vector<12x1xf32>
    %180 = vector.broadcast %179 : vector<12x1xf32> to vector<12x128xf32>
    %181 = vector.broadcast %174 : vector<1x128xf32> to vector<12x128xf32>
    %182 = arith.mulf %180, %181 : vector<12x128xf32>
    %183 = vector.extract_strided_slice %171 {offsets = [1, 0], sizes = [1, 128], strides = [1, 1]} : vector<4x128xf32> to vector<1x128xf32>
    %184 = vector.extract_strided_slice %172 {offsets = [0, 1], sizes = [24, 1], strides = [1, 1]} : vector<24x4xf32> to vector<24x1xf32>
    %185 = vector.broadcast %184 : vector<24x1xf32> to vector<24x128xf32>
    %186 = vector.broadcast %183 : vector<1x128xf32> to vector<24x128xf32>
    %187 = arith.mulf %185, %186 : vector<24x128xf32>
    %188 = arith.addf %178, %187 : vector<24x128xf32>
    %189 = vector.extract_strided_slice %173 {offsets = [0, 1], sizes = [12, 1], strides = [1, 1]} : vector<12x4xf32> to vector<12x1xf32>
    %190 = vector.broadcast %189 : vector<12x1xf32> to vector<12x128xf32>
    %191 = vector.broadcast %183 : vector<1x128xf32> to vector<12x128xf32>
    %192 = arith.mulf %190, %191 : vector<12x128xf32>
    %193 = arith.addf %182, %192 : vector<12x128xf32>
    %194 = vector.extract_strided_slice %171 {offsets = [2, 0], sizes = [1, 128], strides = [1, 1]} : vector<4x128xf32> to vector<1x128xf32>
    %195 = vector.extract_strided_slice %172 {offsets = [0, 2], sizes = [24, 1], strides = [1, 1]} : vector<24x4xf32> to vector<24x1xf32>
    %196 = vector.broadcast %195 : vector<24x1xf32> to vector<24x128xf32>
    %197 = vector.broadcast %194 : vector<1x128xf32> to vector<24x128xf32>
    %198 = arith.mulf %196, %197 : vector<24x128xf32>
    %199 = arith.addf %188, %198 : vector<24x128xf32>
    %200 = vector.extract_strided_slice %173 {offsets = [0, 2], sizes = [12, 1], strides = [1, 1]} : vector<12x4xf32> to vector<12x1xf32>
    %201 = vector.broadcast %200 : vector<12x1xf32> to vector<12x128xf32>
    %202 = vector.broadcast %194 : vector<1x128xf32> to vector<12x128xf32>
    %203 = arith.mulf %201, %202 : vector<12x128xf32>
    %204 = arith.addf %193, %203 : vector<12x128xf32>
    %205 = vector.extract_strided_slice %171 {offsets = [3, 0], sizes = [1, 128], strides = [1, 1]} : vector<4x128xf32> to vector<1x128xf32>
    %206 = vector.extract_strided_slice %172 {offsets = [0, 3], sizes = [24, 1], strides = [1, 1]} : vector<24x4xf32> to vector<24x1xf32>
    %207 = vector.broadcast %206 : vector<24x1xf32> to vector<24x128xf32>
    %208 = vector.broadcast %205 : vector<1x128xf32> to vector<24x128xf32>
    %209 = arith.mulf %207, %208 : vector<24x128xf32>
    %210 = arith.addf %199, %209 : vector<24x128xf32>
    %211 = vector.extract_strided_slice %173 {offsets = [0, 3], sizes = [12, 1], strides = [1, 1]} : vector<12x4xf32> to vector<12x1xf32>
    %212 = vector.broadcast %211 : vector<12x1xf32> to vector<12x128xf32>
    %213 = vector.broadcast %205 : vector<1x128xf32> to vector<12x128xf32>
    %214 = arith.mulf %212, %213 : vector<12x128xf32>
    %215 = arith.addf %204, %214 : vector<12x128xf32>
    %c0_54 = arith.constant 0 : index
    %c0_55 = arith.constant 0 : index
    %216 = vector.load %arg6[%c0_54, %c0_55] : memref<24x1xf32, #tpu.memory_space<vmem>>, vector<24x1xf32>
    %c0_56 = arith.constant 0 : index
    %c0_57 = arith.constant 0 : index
    %217 = vector.load %arg7[%c0_56, %c0_57] : memref<24x1xf32, #tpu.memory_space<vmem>>, vector<24x1xf32>
    %218 = vector.shape_cast %210 : vector<24x128xf32> to vector<1x24x128xf32>
    %cst_58 = arith.constant dense<0.000000e+00> : vector<1xf32>
    %219 = vector.multi_reduction <add>, %218, %cst_58 [1, 2] : vector<1x24x128xf32> to vector<1xf32>
    %220 = vector.shape_cast %219 : vector<1xf32> to vector<1x1x1xf32>
    %221 = vector.extract %220[0, 0, 0] : f32 from vector<1x1x1xf32>
    %222 = arith.mulf %210, %210 : vector<24x128xf32>
    %223 = vector.shape_cast %222 : vector<24x128xf32> to vector<1x24x128xf32>
    %cst_59 = arith.constant dense<0.000000e+00> : vector<1xf32>
    %224 = vector.multi_reduction <add>, %223, %cst_59 [1, 2] : vector<1x24x128xf32> to vector<1xf32>
    %225 = vector.shape_cast %224 : vector<1xf32> to vector<1x1x1xf32>
    %226 = vector.extract %225[0, 0, 0] : f32 from vector<1x1x1xf32>
    %cst_60 = arith.constant 3.072000e+03 : f32
    %227 = arith.divf %221, %cst_60 : f32
    %cst_61 = arith.constant 3.072000e+03 : f32
    %228 = arith.divf %226, %cst_61 : f32
    %229 = arith.mulf %227, %227 : f32
    %230 = arith.subf %228, %229 : f32
    %cst_62 = arith.constant 0.000000e+00 : f32
    %231 = arith.maximumf %230, %cst_62 : f32
    %cst_63 = arith.constant 9.99999974E-6 : f32
    %232 = arith.addf %231, %cst_63 : f32
    %233 = math.rsqrt %232 : f32
    %234 = vector.broadcast %233 : f32 to vector<24x1xf32>
    %235 = arith.mulf %216, %234 : vector<24x1xf32>
    %236 = vector.broadcast %227 : f32 to vector<24x1xf32>
    %237 = arith.mulf %236, %235 : vector<24x1xf32>
    %238 = arith.subf %217, %237 : vector<24x1xf32>
    %239 = vector.broadcast %235 : vector<24x1xf32> to vector<24x128xf32>
    %240 = arith.mulf %210, %239 : vector<24x128xf32>
    %241 = vector.broadcast %238 : vector<24x1xf32> to vector<24x128xf32>
    %242 = arith.addf %240, %241 : vector<24x128xf32>
    %cst_64 = arith.constant 0.000000e+00 : f32
    %cst_65 = arith.constant 6.000000e+00 : f32
    %243 = vector.broadcast %cst_64 : f32 to vector<24x128xf32>
    %244 = arith.maximumf %243, %242 : vector<24x128xf32>
    %245 = vector.broadcast %cst_65 : f32 to vector<24x128xf32>
    %246 = arith.minimumf %245, %244 : vector<24x128xf32>
    %c0_66 = arith.constant 0 : index
    %c0_67 = arith.constant 0 : index
    %247 = vector.load %arg8[%c0_66, %c0_67] : memref<24x1xf32, #tpu.memory_space<vmem>>, vector<24x1xf32>
    %248 = vector.broadcast %247 : vector<24x1xf32> to vector<24x128xf32>
    %249 = arith.mulf %246, %248 : vector<24x128xf32>
    %c0_68 = arith.constant 0 : index
    %c0_69 = arith.constant 0 : index
    %250 = vector.load %arg9[%c0_68, %c0_69] : memref<24x1xf32, #tpu.memory_space<vmem>>, vector<24x1xf32>
    %c0_70 = arith.constant 0 : index
    %c0_71 = arith.constant 0 : index
    %251 = vector.load %arg10[%c0_70, %c0_71] : memref<24x1xf32, #tpu.memory_space<vmem>>, vector<24x1xf32>
    %252 = vector.shape_cast %249 : vector<24x128xf32> to vector<1x24x128xf32>
    %cst_72 = arith.constant dense<0.000000e+00> : vector<1xf32>
    %253 = vector.multi_reduction <add>, %252, %cst_72 [1, 2] : vector<1x24x128xf32> to vector<1xf32>
    %254 = vector.shape_cast %253 : vector<1xf32> to vector<1x1x1xf32>
    %255 = vector.extract %254[0, 0, 0] : f32 from vector<1x1x1xf32>
    %256 = arith.mulf %249, %249 : vector<24x128xf32>
    %257 = vector.shape_cast %256 : vector<24x128xf32> to vector<1x24x128xf32>
    %cst_73 = arith.constant dense<0.000000e+00> : vector<1xf32>
    %258 = vector.multi_reduction <add>, %257, %cst_73 [1, 2] : vector<1x24x128xf32> to vector<1xf32>
    %259 = vector.shape_cast %258 : vector<1xf32> to vector<1x1x1xf32>
    %260 = vector.extract %259[0, 0, 0] : f32 from vector<1x1x1xf32>
    %cst_74 = arith.constant 3.072000e+03 : f32
    %261 = arith.divf %255, %cst_74 : f32
    %cst_75 = arith.constant 3.072000e+03 : f32
    %262 = arith.divf %260, %cst_75 : f32
    %263 = arith.mulf %261, %261 : f32
    %264 = arith.subf %262, %263 : f32
    %cst_76 = arith.constant 0.000000e+00 : f32
    %265 = arith.maximumf %264, %cst_76 : f32
    %cst_77 = arith.constant 9.99999974E-6 : f32
    %266 = arith.addf %265, %cst_77 : f32
    %267 = math.rsqrt %266 : f32
    %268 = vector.broadcast %267 : f32 to vector<24x1xf32>
    %269 = arith.mulf %250, %268 : vector<24x1xf32>
    %270 = vector.broadcast %261 : f32 to vector<24x1xf32>
    %271 = arith.mulf %270, %269 : vector<24x1xf32>
    %272 = arith.subf %251, %271 : vector<24x1xf32>
    %273 = vector.broadcast %269 : vector<24x1xf32> to vector<24x128xf32>
    %274 = arith.mulf %249, %273 : vector<24x128xf32>
    %275 = vector.broadcast %272 : vector<24x1xf32> to vector<24x128xf32>
    %276 = arith.addf %274, %275 : vector<24x128xf32>
    %cst_78 = arith.constant 0.000000e+00 : f32
    %cst_79 = arith.constant 6.000000e+00 : f32
    %277 = vector.broadcast %cst_78 : f32 to vector<24x128xf32>
    %278 = arith.maximumf %277, %276 : vector<24x128xf32>
    %279 = vector.broadcast %cst_79 : f32 to vector<24x128xf32>
    %280 = arith.minimumf %279, %278 : vector<24x128xf32>
    %c0_80 = arith.constant 0 : index
    %c0_81 = arith.constant 0 : index
    %281 = vector.load %arg11[%c0_80, %c0_81] : memref<24x3xf32, #tpu.memory_space<vmem>>, vector<24x3xf32>
    %282 = vector.extract_strided_slice %281 {offsets = [0, 1], sizes = [24, 1], strides = [1, 1]} : vector<24x3xf32> to vector<24x1xf32>
    %283 = vector.broadcast %282 : vector<24x1xf32> to vector<24x128xf32>
    %284 = arith.mulf %246, %283 : vector<24x128xf32>
    %c1_i32_82 = arith.constant 1 : i32
    %285 = tpu.dynamic_rotate %246 by %c1_i32_82 dim 1 : vector<24x128xf32>, i32 -> vector<24x128xf32>
    %c1_i32_83 = arith.constant 1 : i32
    %286 = vector.broadcast %c1_i32_83 : i32 to vector<1x128xi32>
    %287 = arith.cmpi sge, %2, %286 : vector<1x128xi32>
    %cst_84 = arith.constant 0.000000e+00 : f32
    %288 = vector.shape_cast %287 : vector<1x128xi1> to vector<1x128xi1>
    %289 = vector.broadcast %288 : vector<1x128xi1> to vector<24x128xi1>
    %290 = vector.broadcast %cst_84 : f32 to vector<24x128xf32>
    %291 = arith.select %289, %285, %290 : vector<24x128xi1>, vector<24x128xf32>
    %292 = vector.extract_strided_slice %281 {offsets = [0, 0], sizes = [24, 1], strides = [1, 1]} : vector<24x3xf32> to vector<24x1xf32>
    %293 = vector.broadcast %292 : vector<24x1xf32> to vector<24x128xf32>
    %294 = arith.mulf %291, %293 : vector<24x128xf32>
    %295 = arith.addf %284, %294 : vector<24x128xf32>
    %c127_i32_85 = arith.constant 127 : i32
    %296 = tpu.dynamic_rotate %246 by %c127_i32_85 dim 1 : vector<24x128xf32>, i32 -> vector<24x128xf32>
    %c127_i32_86 = arith.constant 127 : i32
    %297 = vector.broadcast %c127_i32_86 : i32 to vector<1x128xi32>
    %298 = arith.cmpi slt, %2, %297 : vector<1x128xi32>
    %cst_87 = arith.constant 0.000000e+00 : f32
    %299 = vector.shape_cast %298 : vector<1x128xi1> to vector<1x128xi1>
    %300 = vector.broadcast %299 : vector<1x128xi1> to vector<24x128xi1>
    %301 = vector.broadcast %cst_87 : f32 to vector<24x128xf32>
    %302 = arith.select %300, %296, %301 : vector<24x128xi1>, vector<24x128xf32>
    %303 = vector.extract_strided_slice %281 {offsets = [0, 2], sizes = [24, 1], strides = [1, 1]} : vector<24x3xf32> to vector<24x1xf32>
    %304 = vector.broadcast %303 : vector<24x1xf32> to vector<24x128xf32>
    %305 = arith.mulf %302, %304 : vector<24x128xf32>
    %306 = arith.addf %295, %305 : vector<24x128xf32>
    %c0_88 = arith.constant 0 : index
    %c0_89 = arith.constant 0 : index
    %307 = vector.load %arg12[%c0_88, %c0_89] : memref<24x1xf32, #tpu.memory_space<vmem>>, vector<24x1xf32>
    %c0_90 = arith.constant 0 : index
    %c0_91 = arith.constant 0 : index
    %308 = vector.load %arg13[%c0_90, %c0_91] : memref<24x1xf32, #tpu.memory_space<vmem>>, vector<24x1xf32>
    %309 = vector.shape_cast %306 : vector<24x128xf32> to vector<1x24x128xf32>
    %cst_92 = arith.constant dense<0.000000e+00> : vector<1xf32>
    %310 = vector.multi_reduction <add>, %309, %cst_92 [1, 2] : vector<1x24x128xf32> to vector<1xf32>
    %311 = vector.shape_cast %310 : vector<1xf32> to vector<1x1x1xf32>
    %312 = vector.extract %311[0, 0, 0] : f32 from vector<1x1x1xf32>
    %313 = arith.mulf %306, %306 : vector<24x128xf32>
    %314 = vector.shape_cast %313 : vector<24x128xf32> to vector<1x24x128xf32>
    %cst_93 = arith.constant dense<0.000000e+00> : vector<1xf32>
    %315 = vector.multi_reduction <add>, %314, %cst_93 [1, 2] : vector<1x24x128xf32> to vector<1xf32>
    %316 = vector.shape_cast %315 : vector<1xf32> to vector<1x1x1xf32>
    %317 = vector.extract %316[0, 0, 0] : f32 from vector<1x1x1xf32>
    %cst_94 = arith.constant 3.072000e+03 : f32
    %318 = arith.divf %312, %cst_94 : f32
    %cst_95 = arith.constant 3.072000e+03 : f32
    %319 = arith.divf %317, %cst_95 : f32
    %320 = arith.mulf %318, %318 : f32
    %321 = arith.subf %319, %320 : f32
    %cst_96 = arith.constant 0.000000e+00 : f32
    %322 = arith.maximumf %321, %cst_96 : f32
    %cst_97 = arith.constant 9.99999974E-6 : f32
    %323 = arith.addf %322, %cst_97 : f32
    %324 = math.rsqrt %323 : f32
    %325 = vector.broadcast %324 : f32 to vector<24x1xf32>
    %326 = arith.mulf %307, %325 : vector<24x1xf32>
    %327 = vector.broadcast %318 : f32 to vector<24x1xf32>
    %328 = arith.mulf %327, %326 : vector<24x1xf32>
    %329 = arith.subf %308, %328 : vector<24x1xf32>
    %330 = vector.broadcast %326 : vector<24x1xf32> to vector<24x128xf32>
    %331 = arith.mulf %306, %330 : vector<24x128xf32>
    %332 = vector.broadcast %329 : vector<24x1xf32> to vector<24x128xf32>
    %333 = arith.addf %331, %332 : vector<24x128xf32>
    %cst_98 = arith.constant 0.000000e+00 : f32
    %cst_99 = arith.constant 6.000000e+00 : f32
    %334 = vector.broadcast %cst_98 : f32 to vector<24x128xf32>
    %335 = arith.maximumf %334, %333 : vector<24x128xf32>
    %336 = vector.broadcast %cst_99 : f32 to vector<24x128xf32>
    %337 = arith.minimumf %336, %335 : vector<24x128xf32>
    %338 = arith.addf %280, %337 : vector<24x128xf32>
    %c0_100 = arith.constant 0 : index
    %c0_101 = arith.constant 0 : index
    %339 = vector.load %arg14[%c0_100, %c0_101] : memref<24x5xf32, #tpu.memory_space<vmem>>, vector<24x5xf32>
    %340 = vector.extract_strided_slice %339 {offsets = [0, 2], sizes = [24, 1], strides = [1, 1]} : vector<24x5xf32> to vector<24x1xf32>
    %341 = vector.broadcast %340 : vector<24x1xf32> to vector<24x128xf32>
    %342 = arith.mulf %246, %341 : vector<24x128xf32>
    %c2_i32_102 = arith.constant 2 : i32
    %343 = tpu.dynamic_rotate %246 by %c2_i32_102 dim 1 : vector<24x128xf32>, i32 -> vector<24x128xf32>
    %c2_i32_103 = arith.constant 2 : i32
    %344 = vector.broadcast %c2_i32_103 : i32 to vector<1x128xi32>
    %345 = arith.cmpi sge, %2, %344 : vector<1x128xi32>
    %cst_104 = arith.constant 0.000000e+00 : f32
    %346 = vector.shape_cast %345 : vector<1x128xi1> to vector<1x128xi1>
    %347 = vector.broadcast %346 : vector<1x128xi1> to vector<24x128xi1>
    %348 = vector.broadcast %cst_104 : f32 to vector<24x128xf32>
    %349 = arith.select %347, %343, %348 : vector<24x128xi1>, vector<24x128xf32>
    %350 = vector.extract_strided_slice %339 {offsets = [0, 0], sizes = [24, 1], strides = [1, 1]} : vector<24x5xf32> to vector<24x1xf32>
    %351 = vector.broadcast %350 : vector<24x1xf32> to vector<24x128xf32>
    %352 = arith.mulf %349, %351 : vector<24x128xf32>
    %353 = arith.addf %342, %352 : vector<24x128xf32>
    %c1_i32_105 = arith.constant 1 : i32
    %354 = tpu.dynamic_rotate %246 by %c1_i32_105 dim 1 : vector<24x128xf32>, i32 -> vector<24x128xf32>
    %c1_i32_106 = arith.constant 1 : i32
    %355 = vector.broadcast %c1_i32_106 : i32 to vector<1x128xi32>
    %356 = arith.cmpi sge, %2, %355 : vector<1x128xi32>
    %cst_107 = arith.constant 0.000000e+00 : f32
    %357 = vector.shape_cast %356 : vector<1x128xi1> to vector<1x128xi1>
    %358 = vector.broadcast %357 : vector<1x128xi1> to vector<24x128xi1>
    %359 = vector.broadcast %cst_107 : f32 to vector<24x128xf32>
    %360 = arith.select %358, %354, %359 : vector<24x128xi1>, vector<24x128xf32>
    %361 = vector.extract_strided_slice %339 {offsets = [0, 1], sizes = [24, 1], strides = [1, 1]} : vector<24x5xf32> to vector<24x1xf32>
    %362 = vector.broadcast %361 : vector<24x1xf32> to vector<24x128xf32>
    %363 = arith.mulf %360, %362 : vector<24x128xf32>
    %364 = arith.addf %353, %363 : vector<24x128xf32>
    %c127_i32_108 = arith.constant 127 : i32
    %365 = tpu.dynamic_rotate %246 by %c127_i32_108 dim 1 : vector<24x128xf32>, i32 -> vector<24x128xf32>
    %c127_i32_109 = arith.constant 127 : i32
    %366 = vector.broadcast %c127_i32_109 : i32 to vector<1x128xi32>
    %367 = arith.cmpi slt, %2, %366 : vector<1x128xi32>
    %cst_110 = arith.constant 0.000000e+00 : f32
    %368 = vector.shape_cast %367 : vector<1x128xi1> to vector<1x128xi1>
    %369 = vector.broadcast %368 : vector<1x128xi1> to vector<24x128xi1>
    %370 = vector.broadcast %cst_110 : f32 to vector<24x128xf32>
    %371 = arith.select %369, %365, %370 : vector<24x128xi1>, vector<24x128xf32>
    %372 = vector.extract_strided_slice %339 {offsets = [0, 3], sizes = [24, 1], strides = [1, 1]} : vector<24x5xf32> to vector<24x1xf32>
    %373 = vector.broadcast %372 : vector<24x1xf32> to vector<24x128xf32>
    %374 = arith.mulf %371, %373 : vector<24x128xf32>
    %375 = arith.addf %364, %374 : vector<24x128xf32>
    %c126_i32_111 = arith.constant 126 : i32
    %376 = tpu.dynamic_rotate %246 by %c126_i32_111 dim 1 : vector<24x128xf32>, i32 -> vector<24x128xf32>
    %c126_i32_112 = arith.constant 126 : i32
    %377 = vector.broadcast %c126_i32_112 : i32 to vector<1x128xi32>
    %378 = arith.cmpi slt, %2, %377 : vector<1x128xi32>
    %cst_113 = arith.constant 0.000000e+00 : f32
    %379 = vector.shape_cast %378 : vector<1x128xi1> to vector<1x128xi1>
    %380 = vector.broadcast %379 : vector<1x128xi1> to vector<24x128xi1>
    %381 = vector.broadcast %cst_113 : f32 to vector<24x128xf32>
    %382 = arith.select %380, %376, %381 : vector<24x128xi1>, vector<24x128xf32>
    %383 = vector.extract_strided_slice %339 {offsets = [0, 4], sizes = [24, 1], strides = [1, 1]} : vector<24x5xf32> to vector<24x1xf32>
    %384 = vector.broadcast %383 : vector<24x1xf32> to vector<24x128xf32>
    %385 = arith.mulf %382, %384 : vector<24x128xf32>
    %386 = arith.addf %375, %385 : vector<24x128xf32>
    %c0_114 = arith.constant 0 : index
    %c0_115 = arith.constant 0 : index
    %387 = vector.load %arg15[%c0_114, %c0_115] : memref<24x1xf32, #tpu.memory_space<vmem>>, vector<24x1xf32>
    %c0_116 = arith.constant 0 : index
    %c0_117 = arith.constant 0 : index
    %388 = vector.load %arg16[%c0_116, %c0_117] : memref<24x1xf32, #tpu.memory_space<vmem>>, vector<24x1xf32>
    %389 = vector.shape_cast %386 : vector<24x128xf32> to vector<1x24x128xf32>
    %cst_118 = arith.constant dense<0.000000e+00> : vector<1xf32>
    %390 = vector.multi_reduction <add>, %389, %cst_118 [1, 2] : vector<1x24x128xf32> to vector<1xf32>
    %391 = vector.shape_cast %390 : vector<1xf32> to vector<1x1x1xf32>
    %392 = vector.extract %391[0, 0, 0] : f32 from vector<1x1x1xf32>
    %393 = arith.mulf %386, %386 : vector<24x128xf32>
    %394 = vector.shape_cast %393 : vector<24x128xf32> to vector<1x24x128xf32>
    %cst_119 = arith.constant dense<0.000000e+00> : vector<1xf32>
    %395 = vector.multi_reduction <add>, %394, %cst_119 [1, 2] : vector<1x24x128xf32> to vector<1xf32>
    %396 = vector.shape_cast %395 : vector<1xf32> to vector<1x1x1xf32>
    %397 = vector.extract %396[0, 0, 0] : f32 from vector<1x1x1xf32>
    %cst_120 = arith.constant 3.072000e+03 : f32
    %398 = arith.divf %392, %cst_120 : f32
    %cst_121 = arith.constant 3.072000e+03 : f32
    %399 = arith.divf %397, %cst_121 : f32
    %400 = arith.mulf %398, %398 : f32
    %401 = arith.subf %399, %400 : f32
    %cst_122 = arith.constant 0.000000e+00 : f32
    %402 = arith.maximumf %401, %cst_122 : f32
    %cst_123 = arith.constant 9.99999974E-6 : f32
    %403 = arith.addf %402, %cst_123 : f32
    %404 = math.rsqrt %403 : f32
    %405 = vector.broadcast %404 : f32 to vector<24x1xf32>
    %406 = arith.mulf %387, %405 : vector<24x1xf32>
    %407 = vector.broadcast %398 : f32 to vector<24x1xf32>
    %408 = arith.mulf %407, %406 : vector<24x1xf32>
    %409 = arith.subf %388, %408 : vector<24x1xf32>
    %410 = vector.broadcast %406 : vector<24x1xf32> to vector<24x128xf32>
    %411 = arith.mulf %386, %410 : vector<24x128xf32>
    %412 = vector.broadcast %409 : vector<24x1xf32> to vector<24x128xf32>
    %413 = arith.addf %411, %412 : vector<24x128xf32>
    %cst_124 = arith.constant 0.000000e+00 : f32
    %cst_125 = arith.constant 6.000000e+00 : f32
    %414 = vector.broadcast %cst_124 : f32 to vector<24x128xf32>
    %415 = arith.maximumf %414, %413 : vector<24x128xf32>
    %416 = vector.broadcast %cst_125 : f32 to vector<24x128xf32>
    %417 = arith.minimumf %416, %415 : vector<24x128xf32>
    %418 = arith.addf %338, %417 : vector<24x128xf32>
    %c0_126 = arith.constant 0 : index
    %c0_127 = arith.constant 0 : index
    %419 = vector.load %arg17[%c0_126, %c0_127] : memref<12x24xf32, #tpu.memory_space<vmem>>, vector<12x24xf32>
    %420 = vector.extract_strided_slice %419 {offsets = [0, 0], sizes = [12, 1], strides = [1, 1]} : vector<12x24xf32> to vector<12x1xf32>
    %421 = vector.extract_strided_slice %418 {offsets = [0, 0], sizes = [1, 128], strides = [1, 1]} : vector<24x128xf32> to vector<1x128xf32>
    %422 = vector.broadcast %420 : vector<12x1xf32> to vector<12x128xf32>
    %423 = vector.broadcast %421 : vector<1x128xf32> to vector<12x128xf32>
    %424 = arith.mulf %422, %423 : vector<12x128xf32>
    %425 = vector.extract_strided_slice %419 {offsets = [0, 1], sizes = [12, 1], strides = [1, 1]} : vector<12x24xf32> to vector<12x1xf32>
    %426 = vector.extract_strided_slice %418 {offsets = [1, 0], sizes = [1, 128], strides = [1, 1]} : vector<24x128xf32> to vector<1x128xf32>
    %427 = vector.broadcast %425 : vector<12x1xf32> to vector<12x128xf32>
    %428 = vector.broadcast %426 : vector<1x128xf32> to vector<12x128xf32>
    %429 = arith.mulf %427, %428 : vector<12x128xf32>
    %430 = arith.addf %424, %429 : vector<12x128xf32>
    %431 = vector.extract_strided_slice %419 {offsets = [0, 2], sizes = [12, 1], strides = [1, 1]} : vector<12x24xf32> to vector<12x1xf32>
    %432 = vector.extract_strided_slice %418 {offsets = [2, 0], sizes = [1, 128], strides = [1, 1]} : vector<24x128xf32> to vector<1x128xf32>
    %433 = vector.broadcast %431 : vector<12x1xf32> to vector<12x128xf32>
    %434 = vector.broadcast %432 : vector<1x128xf32> to vector<12x128xf32>
    %435 = arith.mulf %433, %434 : vector<12x128xf32>
    %436 = arith.addf %430, %435 : vector<12x128xf32>
    %437 = vector.extract_strided_slice %419 {offsets = [0, 3], sizes = [12, 1], strides = [1, 1]} : vector<12x24xf32> to vector<12x1xf32>
    %438 = vector.extract_strided_slice %418 {offsets = [3, 0], sizes = [1, 128], strides = [1, 1]} : vector<24x128xf32> to vector<1x128xf32>
    %439 = vector.broadcast %437 : vector<12x1xf32> to vector<12x128xf32>
    %440 = vector.broadcast %438 : vector<1x128xf32> to vector<12x128xf32>
    %441 = arith.mulf %439, %440 : vector<12x128xf32>
    %442 = arith.addf %436, %441 : vector<12x128xf32>
    %443 = vector.extract_strided_slice %419 {offsets = [0, 4], sizes = [12, 1], strides = [1, 1]} : vector<12x24xf32> to vector<12x1xf32>
    %444 = vector.extract_strided_slice %418 {offsets = [4, 0], sizes = [1, 128], strides = [1, 1]} : vector<24x128xf32> to vector<1x128xf32>
    %445 = vector.broadcast %443 : vector<12x1xf32> to vector<12x128xf32>
    %446 = vector.broadcast %444 : vector<1x128xf32> to vector<12x128xf32>
    %447 = arith.mulf %445, %446 : vector<12x128xf32>
    %448 = arith.addf %442, %447 : vector<12x128xf32>
    %449 = vector.extract_strided_slice %419 {offsets = [0, 5], sizes = [12, 1], strides = [1, 1]} : vector<12x24xf32> to vector<12x1xf32>
    %450 = vector.extract_strided_slice %418 {offsets = [5, 0], sizes = [1, 128], strides = [1, 1]} : vector<24x128xf32> to vector<1x128xf32>
    %451 = vector.broadcast %449 : vector<12x1xf32> to vector<12x128xf32>
    %452 = vector.broadcast %450 : vector<1x128xf32> to vector<12x128xf32>
    %453 = arith.mulf %451, %452 : vector<12x128xf32>
    %454 = arith.addf %448, %453 : vector<12x128xf32>
    %455 = vector.extract_strided_slice %419 {offsets = [0, 6], sizes = [12, 1], strides = [1, 1]} : vector<12x24xf32> to vector<12x1xf32>
    %456 = vector.extract_strided_slice %418 {offsets = [6, 0], sizes = [1, 128], strides = [1, 1]} : vector<24x128xf32> to vector<1x128xf32>
    %457 = vector.broadcast %455 : vector<12x1xf32> to vector<12x128xf32>
    %458 = vector.broadcast %456 : vector<1x128xf32> to vector<12x128xf32>
    %459 = arith.mulf %457, %458 : vector<12x128xf32>
    %460 = arith.addf %454, %459 : vector<12x128xf32>
    %461 = vector.extract_strided_slice %419 {offsets = [0, 7], sizes = [12, 1], strides = [1, 1]} : vector<12x24xf32> to vector<12x1xf32>
    %462 = vector.extract_strided_slice %418 {offsets = [7, 0], sizes = [1, 128], strides = [1, 1]} : vector<24x128xf32> to vector<1x128xf32>
    %463 = vector.broadcast %461 : vector<12x1xf32> to vector<12x128xf32>
    %464 = vector.broadcast %462 : vector<1x128xf32> to vector<12x128xf32>
    %465 = arith.mulf %463, %464 : vector<12x128xf32>
    %466 = arith.addf %460, %465 : vector<12x128xf32>
    %467 = vector.extract_strided_slice %419 {offsets = [0, 8], sizes = [12, 1], strides = [1, 1]} : vector<12x24xf32> to vector<12x1xf32>
    %468 = vector.extract_strided_slice %418 {offsets = [8, 0], sizes = [1, 128], strides = [1, 1]} : vector<24x128xf32> to vector<1x128xf32>
    %469 = vector.broadcast %467 : vector<12x1xf32> to vector<12x128xf32>
    %470 = vector.broadcast %468 : vector<1x128xf32> to vector<12x128xf32>
    %471 = arith.mulf %469, %470 : vector<12x128xf32>
    %472 = arith.addf %466, %471 : vector<12x128xf32>
    %473 = vector.extract_strided_slice %419 {offsets = [0, 9], sizes = [12, 1], strides = [1, 1]} : vector<12x24xf32> to vector<12x1xf32>
    %474 = vector.extract_strided_slice %418 {offsets = [9, 0], sizes = [1, 128], strides = [1, 1]} : vector<24x128xf32> to vector<1x128xf32>
    %475 = vector.broadcast %473 : vector<12x1xf32> to vector<12x128xf32>
    %476 = vector.broadcast %474 : vector<1x128xf32> to vector<12x128xf32>
    %477 = arith.mulf %475, %476 : vector<12x128xf32>
    %478 = arith.addf %472, %477 : vector<12x128xf32>
    %479 = vector.extract_strided_slice %419 {offsets = [0, 10], sizes = [12, 1], strides = [1, 1]} : vector<12x24xf32> to vector<12x1xf32>
    %480 = vector.extract_strided_slice %418 {offsets = [10, 0], sizes = [1, 128], strides = [1, 1]} : vector<24x128xf32> to vector<1x128xf32>
    %481 = vector.broadcast %479 : vector<12x1xf32> to vector<12x128xf32>
    %482 = vector.broadcast %480 : vector<1x128xf32> to vector<12x128xf32>
    %483 = arith.mulf %481, %482 : vector<12x128xf32>
    %484 = arith.addf %478, %483 : vector<12x128xf32>
    %485 = vector.extract_strided_slice %419 {offsets = [0, 11], sizes = [12, 1], strides = [1, 1]} : vector<12x24xf32> to vector<12x1xf32>
    %486 = vector.extract_strided_slice %418 {offsets = [11, 0], sizes = [1, 128], strides = [1, 1]} : vector<24x128xf32> to vector<1x128xf32>
    %487 = vector.broadcast %485 : vector<12x1xf32> to vector<12x128xf32>
    %488 = vector.broadcast %486 : vector<1x128xf32> to vector<12x128xf32>
    %489 = arith.mulf %487, %488 : vector<12x128xf32>
    %490 = arith.addf %484, %489 : vector<12x128xf32>
    %491 = vector.extract_strided_slice %419 {offsets = [0, 12], sizes = [12, 1], strides = [1, 1]} : vector<12x24xf32> to vector<12x1xf32>
    %492 = vector.extract_strided_slice %418 {offsets = [12, 0], sizes = [1, 128], strides = [1, 1]} : vector<24x128xf32> to vector<1x128xf32>
    %493 = vector.broadcast %491 : vector<12x1xf32> to vector<12x128xf32>
    %494 = vector.broadcast %492 : vector<1x128xf32> to vector<12x128xf32>
    %495 = arith.mulf %493, %494 : vector<12x128xf32>
    %496 = arith.addf %490, %495 : vector<12x128xf32>
    %497 = vector.extract_strided_slice %419 {offsets = [0, 13], sizes = [12, 1], strides = [1, 1]} : vector<12x24xf32> to vector<12x1xf32>
    %498 = vector.extract_strided_slice %418 {offsets = [13, 0], sizes = [1, 128], strides = [1, 1]} : vector<24x128xf32> to vector<1x128xf32>
    %499 = vector.broadcast %497 : vector<12x1xf32> to vector<12x128xf32>
    %500 = vector.broadcast %498 : vector<1x128xf32> to vector<12x128xf32>
    %501 = arith.mulf %499, %500 : vector<12x128xf32>
    %502 = arith.addf %496, %501 : vector<12x128xf32>
    %503 = vector.extract_strided_slice %419 {offsets = [0, 14], sizes = [12, 1], strides = [1, 1]} : vector<12x24xf32> to vector<12x1xf32>
    %504 = vector.extract_strided_slice %418 {offsets = [14, 0], sizes = [1, 128], strides = [1, 1]} : vector<24x128xf32> to vector<1x128xf32>
    %505 = vector.broadcast %503 : vector<12x1xf32> to vector<12x128xf32>
    %506 = vector.broadcast %504 : vector<1x128xf32> to vector<12x128xf32>
    %507 = arith.mulf %505, %506 : vector<12x128xf32>
    %508 = arith.addf %502, %507 : vector<12x128xf32>
    %509 = vector.extract_strided_slice %419 {offsets = [0, 15], sizes = [12, 1], strides = [1, 1]} : vector<12x24xf32> to vector<12x1xf32>
    %510 = vector.extract_strided_slice %418 {offsets = [15, 0], sizes = [1, 128], strides = [1, 1]} : vector<24x128xf32> to vector<1x128xf32>
    %511 = vector.broadcast %509 : vector<12x1xf32> to vector<12x128xf32>
    %512 = vector.broadcast %510 : vector<1x128xf32> to vector<12x128xf32>
    %513 = arith.mulf %511, %512 : vector<12x128xf32>
    %514 = arith.addf %508, %513 : vector<12x128xf32>
    %515 = vector.extract_strided_slice %419 {offsets = [0, 16], sizes = [12, 1], strides = [1, 1]} : vector<12x24xf32> to vector<12x1xf32>
    %516 = vector.extract_strided_slice %418 {offsets = [16, 0], sizes = [1, 128], strides = [1, 1]} : vector<24x128xf32> to vector<1x128xf32>
    %517 = vector.broadcast %515 : vector<12x1xf32> to vector<12x128xf32>
    %518 = vector.broadcast %516 : vector<1x128xf32> to vector<12x128xf32>
    %519 = arith.mulf %517, %518 : vector<12x128xf32>
    %520 = arith.addf %514, %519 : vector<12x128xf32>
    %521 = vector.extract_strided_slice %419 {offsets = [0, 17], sizes = [12, 1], strides = [1, 1]} : vector<12x24xf32> to vector<12x1xf32>
    %522 = vector.extract_strided_slice %418 {offsets = [17, 0], sizes = [1, 128], strides = [1, 1]} : vector<24x128xf32> to vector<1x128xf32>
    %523 = vector.broadcast %521 : vector<12x1xf32> to vector<12x128xf32>
    %524 = vector.broadcast %522 : vector<1x128xf32> to vector<12x128xf32>
    %525 = arith.mulf %523, %524 : vector<12x128xf32>
    %526 = arith.addf %520, %525 : vector<12x128xf32>
    %527 = vector.extract_strided_slice %419 {offsets = [0, 18], sizes = [12, 1], strides = [1, 1]} : vector<12x24xf32> to vector<12x1xf32>
    %528 = vector.extract_strided_slice %418 {offsets = [18, 0], sizes = [1, 128], strides = [1, 1]} : vector<24x128xf32> to vector<1x128xf32>
    %529 = vector.broadcast %527 : vector<12x1xf32> to vector<12x128xf32>
    %530 = vector.broadcast %528 : vector<1x128xf32> to vector<12x128xf32>
    %531 = arith.mulf %529, %530 : vector<12x128xf32>
    %532 = arith.addf %526, %531 : vector<12x128xf32>
    %533 = vector.extract_strided_slice %419 {offsets = [0, 19], sizes = [12, 1], strides = [1, 1]} : vector<12x24xf32> to vector<12x1xf32>
    %534 = vector.extract_strided_slice %418 {offsets = [19, 0], sizes = [1, 128], strides = [1, 1]} : vector<24x128xf32> to vector<1x128xf32>
    %535 = vector.broadcast %533 : vector<12x1xf32> to vector<12x128xf32>
    %536 = vector.broadcast %534 : vector<1x128xf32> to vector<12x128xf32>
    %537 = arith.mulf %535, %536 : vector<12x128xf32>
    %538 = arith.addf %532, %537 : vector<12x128xf32>
    %539 = vector.extract_strided_slice %419 {offsets = [0, 20], sizes = [12, 1], strides = [1, 1]} : vector<12x24xf32> to vector<12x1xf32>
    %540 = vector.extract_strided_slice %418 {offsets = [20, 0], sizes = [1, 128], strides = [1, 1]} : vector<24x128xf32> to vector<1x128xf32>
    %541 = vector.broadcast %539 : vector<12x1xf32> to vector<12x128xf32>
    %542 = vector.broadcast %540 : vector<1x128xf32> to vector<12x128xf32>
    %543 = arith.mulf %541, %542 : vector<12x128xf32>
    %544 = arith.addf %538, %543 : vector<12x128xf32>
    %545 = vector.extract_strided_slice %419 {offsets = [0, 21], sizes = [12, 1], strides = [1, 1]} : vector<12x24xf32> to vector<12x1xf32>
    %546 = vector.extract_strided_slice %418 {offsets = [21, 0], sizes = [1, 128], strides = [1, 1]} : vector<24x128xf32> to vector<1x128xf32>
    %547 = vector.broadcast %545 : vector<12x1xf32> to vector<12x128xf32>
    %548 = vector.broadcast %546 : vector<1x128xf32> to vector<12x128xf32>
    %549 = arith.mulf %547, %548 : vector<12x128xf32>
    %550 = arith.addf %544, %549 : vector<12x128xf32>
    %551 = vector.extract_strided_slice %419 {offsets = [0, 22], sizes = [12, 1], strides = [1, 1]} : vector<12x24xf32> to vector<12x1xf32>
    %552 = vector.extract_strided_slice %418 {offsets = [22, 0], sizes = [1, 128], strides = [1, 1]} : vector<24x128xf32> to vector<1x128xf32>
    %553 = vector.broadcast %551 : vector<12x1xf32> to vector<12x128xf32>
    %554 = vector.broadcast %552 : vector<1x128xf32> to vector<12x128xf32>
    %555 = arith.mulf %553, %554 : vector<12x128xf32>
    %556 = arith.addf %550, %555 : vector<12x128xf32>
    %557 = vector.extract_strided_slice %419 {offsets = [0, 23], sizes = [12, 1], strides = [1, 1]} : vector<12x24xf32> to vector<12x1xf32>
    %558 = vector.extract_strided_slice %418 {offsets = [23, 0], sizes = [1, 128], strides = [1, 1]} : vector<24x128xf32> to vector<1x128xf32>
    %559 = vector.broadcast %557 : vector<12x1xf32> to vector<12x128xf32>
    %560 = vector.broadcast %558 : vector<1x128xf32> to vector<12x128xf32>
    %561 = arith.mulf %559, %560 : vector<12x128xf32>
    %562 = arith.addf %556, %561 : vector<12x128xf32>
    %c0_128 = arith.constant 0 : index
    %c0_129 = arith.constant 0 : index
    %563 = vector.load %arg18[%c0_128, %c0_129] : memref<12x1xf32, #tpu.memory_space<vmem>>, vector<12x1xf32>
    %c0_130 = arith.constant 0 : index
    %c0_131 = arith.constant 0 : index
    %564 = vector.load %arg19[%c0_130, %c0_131] : memref<12x1xf32, #tpu.memory_space<vmem>>, vector<12x1xf32>
    %565 = vector.shape_cast %562 : vector<12x128xf32> to vector<1x12x128xf32>
    %cst_132 = arith.constant dense<0.000000e+00> : vector<1xf32>
    %566 = vector.multi_reduction <add>, %565, %cst_132 [1, 2] : vector<1x12x128xf32> to vector<1xf32>
    %567 = vector.shape_cast %566 : vector<1xf32> to vector<1x1x1xf32>
    %568 = vector.extract %567[0, 0, 0] : f32 from vector<1x1x1xf32>
    %569 = arith.mulf %562, %562 : vector<12x128xf32>
    %570 = vector.shape_cast %569 : vector<12x128xf32> to vector<1x12x128xf32>
    %cst_133 = arith.constant dense<0.000000e+00> : vector<1xf32>
    %571 = vector.multi_reduction <add>, %570, %cst_133 [1, 2] : vector<1x12x128xf32> to vector<1xf32>
    %572 = vector.shape_cast %571 : vector<1xf32> to vector<1x1x1xf32>
    %573 = vector.extract %572[0, 0, 0] : f32 from vector<1x1x1xf32>
    %cst_134 = arith.constant 1.536000e+03 : f32
    %574 = arith.divf %568, %cst_134 : f32
    %cst_135 = arith.constant 1.536000e+03 : f32
    %575 = arith.divf %573, %cst_135 : f32
    %576 = arith.mulf %574, %574 : f32
    %577 = arith.subf %575, %576 : f32
    %cst_136 = arith.constant 0.000000e+00 : f32
    %578 = arith.maximumf %577, %cst_136 : f32
    %cst_137 = arith.constant 9.99999974E-6 : f32
    %579 = arith.addf %578, %cst_137 : f32
    %580 = math.rsqrt %579 : f32
    %581 = vector.broadcast %580 : f32 to vector<12x1xf32>
    %582 = arith.mulf %563, %581 : vector<12x1xf32>
    %583 = vector.broadcast %574 : f32 to vector<12x1xf32>
    %584 = arith.mulf %583, %582 : vector<12x1xf32>
    %585 = arith.subf %564, %584 : vector<12x1xf32>
    %586 = vector.broadcast %582 : vector<12x1xf32> to vector<12x128xf32>
    %587 = arith.mulf %562, %586 : vector<12x128xf32>
    %588 = vector.broadcast %585 : vector<12x1xf32> to vector<12x128xf32>
    %589 = arith.addf %587, %588 : vector<12x128xf32>
    %590 = arith.addf %215, %589 : vector<12x128xf32>
    %c0_138 = arith.constant 0 : index
    %c0_139 = arith.constant 0 : index
    %c0_140 = arith.constant 0 : index
    %591 = vector.load %arg21[%c0_138, %c0_139, %c0_140] : memref<1x12x128xf32, #tpu.memory_space<vmem>>, vector<1x12x128xf32>
    %592 = vector.shape_cast %591 : vector<1x12x128xf32> to vector<12x128xf32>
    %593 = vector.shape_cast %590 : vector<12x128xf32> to vector<1x12x128xf32>
    tpu.vector_store %arg21[%c0_138, %c0_139, %c0_140], %593 {strides = array<i32>} : memref<1x12x128xf32, #tpu.memory_space<vmem>>, vector<1x12x128xf32>,
    return
  }
  func.func @transform_0(%arg0: i32) -> (i32, i32, i32) {
    %c0_i32 = arith.constant 0 : i32
    %c0_i32_0 = arith.constant 0 : i32
    %c0_i32_1 = arith.constant 0 : i32
    return %arg0, %c0_i32, %c0_i32_0 : i32, i32, i32
  }
  func.func @transform_1(%arg0: i32) -> (i32, i32) {
    %c0_i32 = arith.constant 0 : i32
    %c0_i32_0 = arith.constant 0 : i32
    %c0_i32_1 = arith.constant 0 : i32
    return %c0_i32, %c0_i32_0 : i32, i32
  }
  func.func @transform_2(%arg0: i32) -> (i32, i32) {
    %c0_i32 = arith.constant 0 : i32
    %c0_i32_0 = arith.constant 0 : i32
    %c0_i32_1 = arith.constant 0 : i32
    return %c0_i32, %c0_i32_0 : i32, i32
  }
  func.func @transform_3(%arg0: i32) -> (i32, i32) {
    %c0_i32 = arith.constant 0 : i32
    %c0_i32_0 = arith.constant 0 : i32
    %c0_i32_1 = arith.constant 0 : i32
    return %c0_i32, %c0_i32_0 : i32, i32
  }
  func.func @transform_4(%arg0: i32) -> (i32, i32) {
    %c0_i32 = arith.constant 0 : i32
    %c0_i32_0 = arith.constant 0 : i32
    %c0_i32_1 = arith.constant 0 : i32
    return %c0_i32, %c0_i32_0 : i32, i32
  }
  func.func @transform_5(%arg0: i32) -> (i32, i32) {
    %c0_i32 = arith.constant 0 : i32
    %c0_i32_0 = arith.constant 0 : i32
    %c0_i32_1 = arith.constant 0 : i32
    return %c0_i32, %c0_i32_0 : i32, i32
  }
  func.func @transform_6(%arg0: i32) -> (i32, i32) {
    %c0_i32 = arith.constant 0 : i32
    %c0_i32_0 = arith.constant 0 : i32
    %c0_i32_1 = arith.constant 0 : i32
    return %c0_i32, %c0_i32_0 : i32, i32
  }
  func.func @transform_7(%arg0: i32) -> (i32, i32) {
    %c0_i32 = arith.constant 0 : i32
    %c0_i32_0 = arith.constant 0 : i32
    %c0_i32_1 = arith.constant 0 : i32
    return %c0_i32, %c0_i32_0 : i32, i32
  }
  func.func @transform_8(%arg0: i32) -> (i32, i32) {
    %c0_i32 = arith.constant 0 : i32
    %c0_i32_0 = arith.constant 0 : i32
    %c0_i32_1 = arith.constant 0 : i32
    return %c0_i32, %c0_i32_0 : i32, i32
  }
  func.func @transform_9(%arg0: i32) -> (i32, i32) {
    %c0_i32 = arith.constant 0 : i32
    %c0_i32_0 = arith.constant 0 : i32
    %c0_i32_1 = arith.constant 0 : i32
    return %c0_i32, %c0_i32_0 : i32, i32
  }
  func.func @transform_10(%arg0: i32) -> (i32, i32) {
    %c0_i32 = arith.constant 0 : i32
    %c0_i32_0 = arith.constant 0 : i32
    %c0_i32_1 = arith.constant 0 : i32
    return %c0_i32, %c0_i32_0 : i32, i32
  }
  func.func @transform_11(%arg0: i32) -> (i32, i32) {
    %c0_i32 = arith.constant 0 : i32
    %c0_i32_0 = arith.constant 0 : i32
    %c0_i32_1 = arith.constant 0 : i32
    return %c0_i32, %c0_i32_0 : i32, i32
  }
  func.func @transform_12(%arg0: i32) -> (i32, i32) {
    %c0_i32 = arith.constant 0 : i32
    %c0_i32_0 = arith.constant 0 : i32
    %c0_i32_1 = arith.constant 0 : i32
    return %c0_i32, %c0_i32_0 : i32, i32
  }
  func.func @transform_13(%arg0: i32) -> (i32, i32) {
    %c0_i32 = arith.constant 0 : i32
    %c0_i32_0 = arith.constant 0 : i32
    %c0_i32_1 = arith.constant 0 : i32
    return %c0_i32, %c0_i32_0 : i32, i32
  }
  func.func @transform_14(%arg0: i32) -> (i32, i32) {
    %c0_i32 = arith.constant 0 : i32
    %c0_i32_0 = arith.constant 0 : i32
    %c0_i32_1 = arith.constant 0 : i32
    return %c0_i32, %c0_i32_0 : i32, i32
  }
  func.func @transform_15(%arg0: i32) -> (i32, i32) {
    %c0_i32 = arith.constant 0 : i32
    %c0_i32_0 = arith.constant 0 : i32
    %c0_i32_1 = arith.constant 0 : i32
    return %c0_i32, %c0_i32_0 : i32, i32
  }
  func.func @transform_16(%arg0: i32) -> (i32, i32) {
    %c0_i32 = arith.constant 0 : i32
    %c0_i32_0 = arith.constant 0 : i32
    %c0_i32_1 = arith.constant 0 : i32
    return %c0_i32, %c0_i32_0 : i32, i32
  }
  func.func @transform_17(%arg0: i32) -> (i32, i32) {
    %c0_i32 = arith.constant 0 : i32
    %c0_i32_0 = arith.constant 0 : i32
    %c0_i32_1 = arith.constant 0 : i32
    return %c0_i32, %c0_i32_0 : i32, i32
  }
  func.func @transform_18(%arg0: i32) -> (i32, i32) {
    %c0_i32 = arith.constant 0 : i32
    %c0_i32_0 = arith.constant 0 : i32
    %c0_i32_1 = arith.constant 0 : i32
    return %c0_i32, %c0_i32_0 : i32, i32
  }
  func.func @transform_19(%arg0: i32) -> (i32, i32) {
    %c0_i32 = arith.constant 0 : i32
    %c0_i32_0 = arith.constant 0 : i32
    %c0_i32_1 = arith.constant 0 : i32
    return %c0_i32, %c0_i32_0 : i32, i32
  }
  func.func @transform_20(%arg0: i32) -> (i32, i32, i32) {
    %c0_i32 = arith.constant 0 : i32
    %c0_i32_0 = arith.constant 0 : i32
    %c0_i32_1 = arith.constant 0 : i32
    return %arg0, %c0_i32, %c0_i32_0 : i32, i32, i32
  }
}

</mosaic_0001>

<llo_original>
// kernel: tpu_custom_call.1
$region0: #{tpu_custom_call.1}
  #allocation0 [shape = 'u32[]', space=smem, size = 0x4, offset = 0x4, fixed_abs, tag = 'smem constant byte address 0x4 - core index']
  #allocation1 [shape = 'u32[144,128]{1,0:T(1,128)}', space=vmem, size = 0x12000, scoped, tag = 'internal scratch']
  %s0 = inlined_call_operand.vmem [shape: f32[2,4,128], index: 0, kind: input, shape index: {}]
  %s1 = inlined_call_operand.vmem [shape: f32[1,4], index: 1, kind: input, shape index: {}]
  %s2 = inlined_call_operand.vmem [shape: f32[4,1], index: 2, kind: input, shape index: {}]
  %s3 = inlined_call_operand.vmem [shape: f32[2,7], index: 3, kind: input, shape index: {}]
  %s4 = inlined_call_operand.vmem [shape: f32[24,4], index: 4, kind: input, shape index: {}]
  %s5 = inlined_call_operand.vmem [shape: f32[24,1], index: 5, kind: input, shape index: {}]
  %s6 = inlined_call_operand.vmem [shape: f32[24,1], index: 6, kind: input, shape index: {}]
  %s7 = inlined_call_operand.vmem [shape: f32[24,1], index: 7, kind: input, shape index: {}]
  %s8 = inlined_call_operand.vmem [shape: f32[24,1], index: 8, kind: input, shape index: {}]
  %s9 = inlined_call_operand.vmem [shape: f32[24,1], index: 9, kind: input, shape index: {}]
  %s10 = inlined_call_operand.vmem [shape: f32[24,3], index: 10, kind: input, shape index: {}]
  %s11 = inlined_call_operand.vmem [shape: f32[24,1], index: 11, kind: input, shape index: {}]
  %s12 = inlined_call_operand.vmem [shape: f32[24,1], index: 12, kind: input, shape index: {}]
  %s13 = inlined_call_operand.vmem [shape: f32[24,5], index: 13, kind: input, shape index: {}]
  %s14 = inlined_call_operand.vmem [shape: f32[24,1], index: 14, kind: input, shape index: {}]
  %s15 = inlined_call_operand.vmem [shape: f32[24,1], index: 15, kind: input, shape index: {}]
  %s16 = inlined_call_operand.vmem [shape: f32[12,24], index: 16, kind: input, shape index: {}]
  %s17 = inlined_call_operand.vmem [shape: f32[12,1], index: 17, kind: input, shape index: {}]
  %s18 = inlined_call_operand.vmem [shape: f32[12,1], index: 18, kind: input, shape index: {}]
  %s19 = inlined_call_operand.vmem [shape: f32[12,4], index: 19, kind: input, shape index: {}]
  %s20 = inlined_call_operand.vmem [shape: f32[2,12,128], index: 20, kind: output, shape index: {}]
  %s21 = sld [smem:[#allocation0]]
  $region113: #{tpu_custom_call.1} parent=0
    _
  %s23 = ssub.s32 1, %s21
  %s24 = scalar_select 0, %s23, %s21
  loop: start=0, step=1, limit=4
  $region2: #{tpu_custom_call.1} parent=0 // loop_pre_header
    _
  $region3: #{tpu_custom_call.1} parent=0 // loop_header
    %s26 = sphi 0, %s30
    %p27 = scmp.ge.s32.totalorder %s26, 4
    %s36 = sphi 0, %s38
    %s39 = sphi 0, %s36
    %s40 = sphi 0, %s39
    %s56 = sphi 0, %s40
    %s60 = sphi 0, %s60
    %s62 = sphi 0, %s60
    %s63 = sphi 0, %s62
    %s77 = sphi 0, %s63
    %s81 = sphi 0, %s81
    %s83 = sphi 0, %s81
    %s84 = sphi 0, %s83
    %s98 = sphi 0, %s84
    %s102 = sphi 0, %s102
    %s104 = sphi 0, %s102
    %s105 = sphi 0, %s104
    %s119 = sphi 0, %s105
    %s123 = sphi 0, %s123
    %s125 = sphi 0, %s123
    %s126 = sphi 0, %s125
    %s140 = sphi 0, %s126
    %s144 = sphi 0, %s144
    %s146 = sphi 0, %s144
    %s147 = sphi 0, %s146
    %s161 = sphi 0, %s147
    %s165 = sphi 0, %s165
    %s167 = sphi 0, %s165
    %s168 = sphi 0, %s167
    %s182 = sphi 0, %s168
    %s186 = sphi 0, %s186
    %s188 = sphi 0, %s186
    %s189 = sphi 0, %s188
    %s203 = sphi 0, %s189
    %s207 = sphi 0, %s207
    %s209 = sphi 0, %s207
    %s210 = sphi 0, %s209
    %s224 = sphi 0, %s210
    %s228 = sphi 0, %s228
    %s230 = sphi 0, %s228
    %s231 = sphi 0, %s230
    %s245 = sphi 0, %s231
    %s249 = sphi 0, %s249
    %s251 = sphi 0, %s249
    %s252 = sphi 0, %s251
    %s266 = sphi 0, %s252
    %s270 = sphi 0, %s270
    %s272 = sphi 0, %s270
    %s273 = sphi 0, %s272
    %s287 = sphi 0, %s273
    %s291 = sphi 0, %s291
    %s293 = sphi 0, %s291
    %s294 = sphi 0, %s293
    %s308 = sphi 0, %s294
    %s312 = sphi 0, %s312
    %s314 = sphi 0, %s312
    %s315 = sphi 0, %s314
    %s329 = sphi 0, %s315
    %s333 = sphi 0, %s333
    %s335 = sphi 0, %s333
    %s336 = sphi 0, %s335
    %s350 = sphi 0, %s336
    %s354 = sphi 0, %s354
    %s356 = sphi 0, %s354
    %s357 = sphi 0, %s356
    %s371 = sphi 0, %s357
    %s375 = sphi 0, %s375
    %s377 = sphi 0, %s375
    %s378 = sphi 0, %s377
    %s392 = sphi 0, %s378
    %s396 = sphi 0, %s396
    %s398 = sphi 0, %s396
    %s399 = sphi 0, %s398
    %s413 = sphi 0, %s399
    %s417 = sphi 0, %s417
    %s419 = sphi 0, %s417
    %s420 = sphi 0, %s419
    %s434 = sphi 0, %s420
    %s438 = sphi 0, %s438
    %s440 = sphi 0, %s438
    %s441 = sphi 0, %s440
    %s455 = sphi 0, %s441
    %s461 = sphi 0, %s463
    %s464 = sphi 0, %s461
    %s465 = sphi 0, %s464
    %s481 = sphi 0, %s465
  $region4: #{tpu_custom_call.1} parent=0 // loop_header_branch
    %29 = sbr.rel (%p27) target = $region8
  $region5: #{tpu_custom_call.1} parent=0 // loop_body
    %s31 = ssub.s32 %s26, 1
    %s32 = ssub.s32 %s26, 2
    %s33 = sadd.s32 %s26, 1
    %s34 = ssub.s32 %s26, %s33
    %p35 = scmp.eq.s32.totalorder %s34, 0
    %s37 = sadd.s32 %s36, 1
    %s38 = scalar_select %p35, %s36, %s37
    %p41 = pneg %p35
    %p42 = scmp.eq.s32.totalorder %s26, 1
    %p43 = por %p41, %p42
    %p44 = scmp.ne.s32.totalorder %s36, %s39
    %p45 = scmp.eq.s32.totalorder %s26, 0
    %p46 = por %p44, %p45
    %p47 = scmp.ne.s32.totalorder %s36, %s39
    %p48 = scmp.eq.s32.totalorder %s31, 1
    %p49 = por %p47, %p48
    %p50 = scmp.ne.s32.totalorder %s39, %s40
    %p51 = scmp.eq.s32.totalorder %s31, 0
    %p52 = por %p50, %p51
    %p53 = scmp.ne.s32.totalorder %s39, %s40
    %p54 = scmp.eq.s32.totalorder %s32, 1
    %p55 = por %p53, %p54
    %p57 = scmp.ne.s32.totalorder %s40, %s56
    %p58 = scmp.eq.s32.totalorder %s32, 0
    %p59 = por %p57, %p58
    %s61 = sadd.s32 %s60, 1
    %p64 = scmp.eq.s32.totalorder %s26, 1
    %p65 = scmp.ne.s32.totalorder %s60, %s62
    %p66 = scmp.eq.s32.totalorder %s26, 0
    %p67 = por %p65, %p66
    %p68 = scmp.ne.s32.totalorder %s60, %s62
    %p69 = scmp.eq.s32.totalorder %s31, 1
    %p70 = por %p68, %p69
    %p71 = scmp.ne.s32.totalorder %s62, %s63
    %p72 = scmp.eq.s32.totalorder %s31, 0
    %p73 = por %p71, %p72
    %p74 = scmp.ne.s32.totalorder %s62, %s63
    %p75 = scmp.eq.s32.totalorder %s32, 1
    %p76 = por %p74, %p75
    %p78 = scmp.ne.s32.totalorder %s63, %s77
    %p79 = scmp.eq.s32.totalorder %s32, 0
    %p80 = por %p78, %p79
    %s82 = sadd.s32 %s81, 1
    %p85 = scmp.eq.s32.totalorder %s26, 1
    %p86 = scmp.ne.s32.totalorder %s81, %s83
    %p87 = scmp.eq.s32.totalorder %s26, 0
    %p88 = por %p86, %p87
    %p89 = scmp.ne.s32.totalorder %s81, %s83
    %p90 = scmp.eq.s32.totalorder %s31, 1
    %p91 = por %p89, %p90
    %p92 = scmp.ne.s32.totalorder %s83, %s84
    %p93 = scmp.eq.s32.totalorder %s31, 0
    %p94 = por %p92, %p93
    %p95 = scmp.ne.s32.totalorder %s83, %s84
    %p96 = scmp.eq.s32.totalorder %s32, 1
    %p97 = por %p95, %p96
    %p99 = scmp.ne.s32.totalorder %s84, %s98
    %p100 = scmp.eq.s32.totalorder %s32, 0
    %p101 = por %p99, %p100
    %s103 = sadd.s32 %s102, 1
    %p106 = scmp.eq.s32.totalorder %s26, 1
    %p107 = scmp.ne.s32.totalorder %s102, %s104
    %p108 = scmp.eq.s32.totalorder %s26, 0
    %p109 = por %p107, %p108
    %p110 = scmp.ne.s32.totalorder %s102, %s104
    %p111 = scmp.eq.s32.totalorder %s31, 1
    %p112 = por %p110, %p111
    %p113 = scmp.ne.s32.totalorder %s104, %s105
    %p114 = scmp.eq.s32.totalorder %s31, 0
    %p115 = por %p113, %p114
    %p116 = scmp.ne.s32.totalorder %s104, %s105
    %p117 = scmp.eq.s32.totalorder %s32, 1
    %p118 = por %p116, %p117
    %p120 = scmp.ne.s32.totalorder %s105, %s119
    %p121 = scmp.eq.s32.totalorder %s32, 0
    %p122 = por %p120, %p121
    %s124 = sadd.s32 %s123, 1
    %p127 = scmp.eq.s32.totalorder %s26, 1
    %p128 = scmp.ne.s32.totalorder %s123, %s125
    %p129 = scmp.eq.s32.totalorder %s26, 0
    %p130 = por %p128, %p129
    %p131 = scmp.ne.s32.totalorder %s123, %s125
    %p132 = scmp.eq.s32.totalorder %s31, 1
    %p133 = por %p131, %p132
    %p134 = scmp.ne.s32.totalorder %s125, %s126
    %p135 = scmp.eq.s32.totalorder %s31, 0
    %p136 = por %p134, %p135
    %p137 = scmp.ne.s32.totalorder %s125, %s126
    %p138 = scmp.eq.s32.totalorder %s32, 1
    %p139 = por %p137, %p138
    %p141 = scmp.ne.s32.totalorder %s126, %s140
    %p142 = scmp.eq.s32.totalorder %s32, 0
    %p143 = por %p141, %p142
    %s145 = sadd.s32 %s144, 1
    %p148 = scmp.eq.s32.totalorder %s26, 1
    %p149 = scmp.ne.s32.totalorder %s144, %s146
    %p150 = scmp.eq.s32.totalorder %s26, 0
    %p151 = por %p149, %p150
    %p152 = scmp.ne.s32.totalorder %s144, %s146
    %p153 = scmp.eq.s32.totalorder %s31, 1
    %p154 = por %p152, %p153
    %p155 = scmp.ne.s32.totalorder %s146, %s147
    %p156 = scmp.eq.s32.totalorder %s31, 0
    %p157 = por %p155, %p156
    %p158 = scmp.ne.s32.totalorder %s146, %s147
    %p159 = scmp.eq.s32.totalorder %s32, 1
    %p160 = por %p158, %p159
    %p162 = scmp.ne.s32.totalorder %s147, %s161
    %p163 = scmp.eq.s32.totalorder %s32, 0
    %p164 = por %p162, %p163
    %s166 = sadd.s32 %s165, 1
    %p169 = scmp.eq.s32.totalorder %s26, 1
    %p170 = scmp.ne.s32.totalorder %s165, %s167
    %p171 = scmp.eq.s32.totalorder %s26, 0
    %p172 = por %p170, %p171
    %p173 = scmp.ne.s32.totalorder %s165, %s167
    %p174 = scmp.eq.s32.totalorder %s31, 1
    %p175 = por %p173, %p174
    %p176 = scmp.ne.s32.totalorder %s167, %s168
    %p177 = scmp.eq.s32.totalorder %s31, 0
    %p178 = por %p176, %p177
    %p179 = scmp.ne.s32.totalorder %s167, %s168
    %p180 = scmp.eq.s32.totalorder %s32, 1
    %p181 = por %p179, %p180
    %p183 = scmp.ne.s32.totalorder %s168, %s182
    %p184 = scmp.eq.s32.totalorder %s32, 0
    %p185 = por %p183, %p184
    %s187 = sadd.s32 %s186, 1
    %p190 = scmp.eq.s32.totalorder %s26, 1
    %p191 = scmp.ne.s32.totalorder %s186, %s188
    %p192 = scmp.eq.s32.totalorder %s26, 0
    %p193 = por %p191, %p192
    %p194 = scmp.ne.s32.totalorder %s186, %s188
    %p195 = scmp.eq.s32.totalorder %s31, 1
    %p196 = por %p194, %p195
    %p197 = scmp.ne.s32.totalorder %s188, %s189
    %p198 = scmp.eq.s32.totalorder %s31, 0
    %p199 = por %p197, %p198
    %p200 = scmp.ne.s32.totalorder %s188, %s189
    %p201 = scmp.eq.s32.totalorder %s32, 1
    %p202 = por %p200, %p201
    %p204 = scmp.ne.s32.totalorder %s189, %s203
    %p205 = scmp.eq.s32.totalorder %s32, 0
    %p206 = por %p204, %p205
    %s208 = sadd.s32 %s207, 1
    %p211 = scmp.eq.s32.totalorder %s26, 1
    %p212 = scmp.ne.s32.totalorder %s207, %s209
    %p213 = scmp.eq.s32.totalorder %s26, 0
    %p214 = por %p212, %p213
    %p215 = scmp.ne.s32.totalorder %s207, %s209
    %p216 = scmp.eq.s32.totalorder %s31, 1
    %p217 = por %p215, %p216
    %p218 = scmp.ne.s32.totalorder %s209, %s210
    %p219 = scmp.eq.s32.totalorder %s31, 0
    %p220 = por %p218, %p219
    %p221 = scmp.ne.s32.totalorder %s209, %s210
    %p222 = scmp.eq.s32.totalorder %s32, 1
    %p223 = por %p221, %p222
    %p225 = scmp.ne.s32.totalorder %s210, %s224
    %p226 = scmp.eq.s32.totalorder %s32, 0
    %p227 = por %p225, %p226
    %s229 = sadd.s32 %s228, 1
    %p232 = scmp.eq.s32.totalorder %s26, 1
    %p233 = scmp.ne.s32.totalorder %s228, %s230
    %p234 = scmp.eq.s32.totalorder %s26, 0
    %p235 = por %p233, %p234
    %p236 = scmp.ne.s32.totalorder %s228, %s230
    %p237 = scmp.eq.s32.totalorder %s31, 1
    %p238 = por %p236, %p237
    %p239 = scmp.ne.s32.totalorder %s230, %s231
    %p240 = scmp.eq.s32.totalorder %s31, 0
    %p241 = por %p239, %p240
    %p242 = scmp.ne.s32.totalorder %s230, %s231
    %p243 = scmp.eq.s32.totalorder %s32, 1
    %p244 = por %p242, %p243
    %p246 = scmp.ne.s32.totalorder %s231, %s245
    %p247 = scmp.eq.s32.totalorder %s32, 0
    %p248 = por %p246, %p247
    %s250 = sadd.s32 %s249, 1
    %p253 = scmp.eq.s32.totalorder %s26, 1
    %p254 = scmp.ne.s32.totalorder %s249, %s251
    %p255 = scmp.eq.s32.totalorder %s26, 0
    %p256 = por %p254, %p255
    %p257 = scmp.ne.s32.totalorder %s249, %s251
    %p258 = scmp.eq.s32.totalorder %s31, 1
    %p259 = por %p257, %p258
    %p260 = scmp.ne.s32.totalorder %s251, %s252
    %p261 = scmp.eq.s32.totalorder %s31, 0
    %p262 = por %p260, %p261
    %p263 = scmp.ne.s32.totalorder %s251, %s252
    %p264 = scmp.eq.s32.totalorder %s32, 1
    %p265 = por %p263, %p264
    %p267 = scmp.ne.s32.totalorder %s252, %s266
    %p268 = scmp.eq.s32.totalorder %s32, 0
    %p269 = por %p267, %p268
    %s271 = sadd.s32 %s270, 1
    %p274 = scmp.eq.s32.totalorder %s26, 1
    %p275 = scmp.ne.s32.totalorder %s270, %s272
    %p276 = scmp.eq.s32.totalorder %s26, 0
    %p277 = por %p275, %p276
    %p278 = scmp.ne.s32.totalorder %s270, %s272
    %p279 = scmp.eq.s32.totalorder %s31, 1
    %p280 = por %p278, %p279
    %p281 = scmp.ne.s32.totalorder %s272, %s273
    %p282 = scmp.eq.s32.totalorder %s31, 0
    %p283 = por %p281, %p282
    %p284 = scmp.ne.s32.totalorder %s272, %s273
    %p285 = scmp.eq.s32.totalorder %s32, 1
    %p286 = por %p284, %p285
    %p288 = scmp.ne.s32.totalorder %s273, %s287
    %p289 = scmp.eq.s32.totalorder %s32, 0
    %p290 = por %p288, %p289
    %s292 = sadd.s32 %s291, 1
    %p295 = scmp.eq.s32.totalorder %s26, 1
    %p296 = scmp.ne.s32.totalorder %s291, %s293
    %p297 = scmp.eq.s32.totalorder %s26, 0
    %p298 = por %p296, %p297
    %p299 = scmp.ne.s32.totalorder %s291, %s293
    %p300 = scmp.eq.s32.totalorder %s31, 1
    %p301 = por %p299, %p300
    %p302 = scmp.ne.s32.totalorder %s293, %s294
    %p303 = scmp.eq.s32.totalorder %s31, 0
    %p304 = por %p302, %p303
    %p305 = scmp.ne.s32.totalorder %s293, %s294
    %p306 = scmp.eq.s32.totalorder %s32, 1
    %p307 = por %p305, %p306
    %p309 = scmp.ne.s32.totalorder %s294, %s308
    %p310 = scmp.eq.s32.totalorder %s32, 0
    %p311 = por %p309, %p310
    %s313 = sadd.s32 %s312, 1
    %p316 = scmp.eq.s32.totalorder %s26, 1
    %p317 = scmp.ne.s32.totalorder %s312, %s314
    %p318 = scmp.eq.s32.totalorder %s26, 0
    %p319 = por %p317, %p318
    %p320 = scmp.ne.s32.totalorder %s312, %s314
    %p321 = scmp.eq.s32.totalorder %s31, 1
    %p322 = por %p320, %p321
    %p323 = scmp.ne.s32.totalorder %s314, %s315
    %p324 = scmp.eq.s32.totalorder %s31, 0
    %p325 = por %p323, %p324
    %p326 = scmp.ne.s32.totalorder %s314, %s315
    %p327 = scmp.eq.s32.totalorder %s32, 1
    %p328 = por %p326, %p327
    %p330 = scmp.ne.s32.totalorder %s315, %s329
    %p331 = scmp.eq.s32.totalorder %s32, 0
    %p332 = por %p330, %p331
    %s334 = sadd.s32 %s333, 1
    %p337 = scmp.eq.s32.totalorder %s26, 1
    %p338 = scmp.ne.s32.totalorder %s333, %s335
    %p339 = scmp.eq.s32.totalorder %s26, 0
    %p340 = por %p338, %p339
    %p341 = scmp.ne.s32.totalorder %s333, %s335
    %p342 = scmp.eq.s32.totalorder %s31, 1
    %p343 = por %p341, %p342
    %p344 = scmp.ne.s32.totalorder %s335, %s336
    %p345 = scmp.eq.s32.totalorder %s31, 0
    %p346 = por %p344, %p345
    %p347 = scmp.ne.s32.totalorder %s335, %s336
    %p348 = scmp.eq.s32.totalorder %s32, 1
    %p349 = por %p347, %p348
    %p351 = scmp.ne.s32.totalorder %s336, %s350
    %p352 = scmp.eq.s32.totalorder %s32, 0
    %p353 = por %p351, %p352
    %s355 = sadd.s32 %s354, 1
    %p358 = scmp.eq.s32.totalorder %s26, 1
    %p359 = scmp.ne.s32.totalorder %s354, %s356
    %p360 = scmp.eq.s32.totalorder %s26, 0
    %p361 = por %p359, %p360
    %p362 = scmp.ne.s32.totalorder %s354, %s356
    %p363 = scmp.eq.s32.totalorder %s31, 1
    %p364 = por %p362, %p363
    %p365 = scmp.ne.s32.totalorder %s356, %s357
    %p366 = scmp.eq.s32.totalorder %s31, 0
    %p367 = por %p365, %p366
    %p368 = scmp.ne.s32.totalorder %s356, %s357
    %p369 = scmp.eq.s32.totalorder %s32, 1
    %p370 = por %p368, %p369
    %p372 = scmp.ne.s32.totalorder %s357, %s371
    %p373 = scmp.eq.s32.totalorder %s32, 0
    %p374 = por %p372, %p373
    %s376 = sadd.s32 %s375, 1
    %p379 = scmp.eq.s32.totalorder %s26, 1
    %p380 = scmp.ne.s32.totalorder %s375, %s377
    %p381 = scmp.eq.s32.totalorder %s26, 0
    %p382 = por %p380, %p381
    %p383 = scmp.ne.s32.totalorder %s375, %s377
    %p384 = scmp.eq.s32.totalorder %s31, 1
    %p385 = por %p383, %p384
    %p386 = scmp.ne.s32.totalorder %s377, %s378
    %p387 = scmp.eq.s32.totalorder %s31, 0
    %p388 = por %p386, %p387
    %p389 = scmp.ne.s32.totalorder %s377, %s378
    %p390 = scmp.eq.s32.totalorder %s32, 1
    %p391 = por %p389, %p390
    %p393 = scmp.ne.s32.totalorder %s378, %s392
    %p394 = scmp.eq.s32.totalorder %s32, 0
    %p395 = por %p393, %p394
    %s397 = sadd.s32 %s396, 1
    %p400 = scmp.eq.s32.totalorder %s26, 1
    %p401 = scmp.ne.s32.totalorder %s396, %s398
    %p402 = scmp.eq.s32.totalorder %s26, 0
    %p403 = por %p401, %p402
    %p404 = scmp.ne.s32.totalorder %s396, %s398
    %p405 = scmp.eq.s32.totalorder %s31, 1
    %p406 = por %p404, %p405
    %p407 = scmp.ne.s32.totalorder %s398, %s399
    %p408 = scmp.eq.s32.totalorder %s31, 0
    %p409 = por %p407, %p408
    %p410 = scmp.ne.s32.totalorder %s398, %s399
    %p411 = scmp.eq.s32.totalorder %s32, 1
    %p412 = por %p410, %p411
    %p414 = scmp.ne.s32.totalorder %s399, %s413
    %p415 = scmp.eq.s32.totalorder %s32, 0
    %p416 = por %p414, %p415
    %s418 = sadd.s32 %s417, 1
    %p421 = scmp.eq.s32.totalorder %s26, 1
    %p422 = scmp.ne.s32.totalorder %s417, %s419
    %p423 = scmp.eq.s32.totalorder %s26, 0
    %p424 = por %p422, %p423
    %p425 = scmp.ne.s32.totalorder %s417, %s419
    %p426 = scmp.eq.s32.totalorder %s31, 1
    %p427 = por %p425, %p426
    %p428 = scmp.ne.s32.totalorder %s419, %s420
    %p429 = scmp.eq.s32.totalorder %s31, 0
    %p430 = por %p428, %p429
    %p431 = scmp.ne.s32.totalorder %s419, %s420
    %p432 = scmp.eq.s32.totalorder %s32, 1
    %p433 = por %p431, %p432
    %p435 = scmp.ne.s32.totalorder %s420, %s434
    %p436 = scmp.eq.s32.totalorder %s32, 0
    %p437 = por %p435, %p436
    %s439 = sadd.s32 %s438, 1
    %p442 = scmp.eq.s32.totalorder %s26, 1
    %p443 = scmp.ne.s32.totalorder %s438, %s440
    %p444 = scmp.eq.s32.totalorder %s26, 0
    %p445 = por %p443, %p444
    %p446 = scmp.ne.s32.totalorder %s438, %s440
    %p447 = scmp.eq.s32.totalorder %s31, 1
    %p448 = por %p446, %p447
    %p449 = scmp.ne.s32.totalorder %s440, %s441
    %p450 = scmp.eq.s32.totalorder %s31, 0
    %p451 = por %p449, %p450
    %p452 = scmp.ne.s32.totalorder %s440, %s441
    %p453 = scmp.eq.s32.totalorder %s32, 1
    %p454 = por %p452, %p453
    %p456 = scmp.ne.s32.totalorder %s441, %s455
    %p457 = scmp.eq.s32.totalorder %s32, 0
    %p458 = por %p456, %p457
    %s459 = ssub.s32 %s26, %s33
    %p460 = scmp.eq.s32.totalorder %s459, 0
    %s462 = sadd.s32 %s461, 1
    %s463 = scalar_select %p460, %s461, %s462
    %p466 = pneg %p460
    %p467 = scmp.eq.s32.totalorder %s26, 1
    %p468 = por %p466, %p467
    %p469 = scmp.ne.s32.totalorder %s461, %s464
    %p470 = scmp.eq.s32.totalorder %s26, 0
    %p471 = por %p469, %p470
    %p472 = scmp.ne.s32.totalorder %s461, %s464
    %p473 = scmp.eq.s32.totalorder %s31, 1
    %p474 = por %p472, %p473
    %p475 = scmp.ne.s32.totalorder %s464, %s465
    %p476 = scmp.eq.s32.totalorder %s31, 0
    %p477 = por %p475, %p476
    %p478 = scmp.ne.s32.totalorder %s464, %s465
    %p479 = scmp.eq.s32.totalorder %s32, 1
    %p480 = por %p478, %p479
    %p482 = scmp.ne.s32.totalorder %s465, %s481
    %p483 = scmp.eq.s32.totalorder %s32, 0
    %p484 = por %p482, %p483
    %p485 = scmp.le.s32.totalorder 1, %s26
    %p486 = scmp.lt.s32.totalorder %s26, 3
    %p487 = pnand %p485, %p486
    %p488 = pneg %p487
    // Predicated region
    $region9: #{tpu_custom_call.1} parent=5 // pred_check
      _
    $region10: #{tpu_custom_call.1} parent=5 // pred_check_branch
      %490 = sbr.rel (%p487) target = $region12
    $region11: #{tpu_custom_call.1} parent=5 // pred_region
      %s491 = ssub.s32 %s26, 1
      // Predicated region
      $region13: #{tpu_custom_call.1} parent=11 // pred_check
        %p492 = pneg %p73
      $region14: #{tpu_custom_call.1} parent=11 // pred_check_branch
        %494 = sbr.rel (%p492) target = $region16
      $region15: #{tpu_custom_call.1} parent=11 // pred_region
        _
      $region16: #{tpu_custom_call.1} parent=11 // pred_fallthru
        _
      // Predicated region
      $region17: #{tpu_custom_call.1} parent=11 // pred_check
        %p495 = pneg %p94
      $region18: #{tpu_custom_call.1} parent=11 // pred_check_branch
        %497 = sbr.rel (%p495) target = $region20
      $region19: #{tpu_custom_call.1} parent=11 // pred_region
        _
      $region20: #{tpu_custom_call.1} parent=11 // pred_fallthru
        _
      // Predicated region
      $region21: #{tpu_custom_call.1} parent=11 // pred_check
        %p498 = pneg %p115
      $region22: #{tpu_custom_call.1} parent=11 // pred_check_branch
        %500 = sbr.rel (%p498) target = $region24
      $region23: #{tpu_custom_call.1} parent=11 // pred_region
        _
      $region24: #{tpu_custom_call.1} parent=11 // pred_fallthru
        _
      // Predicated region
      $region25: #{tpu_custom_call.1} parent=11 // pred_check
        %p501 = pneg %p136
      $region26: #{tpu_custom_call.1} parent=11 // pred_check_branch
        %503 = sbr.rel (%p501) target = $region28
      $region27: #{tpu_custom_call.1} parent=11 // pred_region
        _
      $region28: #{tpu_custom_call.1} parent=11 // pred_fallthru
        _
      // Predicated region
      $region29: #{tpu_custom_call.1} parent=11 // pred_check
        %p504 = pneg %p157
      $region30: #{tpu_custom_call.1} parent=11 // pred_check_branch
        %506 = sbr.rel (%p504) target = $region32
      $region31: #{tpu_custom_call.1} parent=11 // pred_region
        _
      $region32: #{tpu_custom_call.1} parent=11 // pred_fallthru
        _
      // Predicated region
      $region33: #{tpu_custom_call.1} parent=11 // pred_check
        %p507 = pneg %p178
      $region34: #{tpu_custom_call.1} parent=11 // pred_check_branch
        %509 = sbr.rel (%p507) target = $region36
      $region35: #{tpu_custom_call.1} parent=11 // pred_region
        _
      $region36: #{tpu_custom_call.1} parent=11 // pred_fallthru
        _
      // Predicated region
      $region37: #{tpu_custom_call.1} parent=11 // pred_check
        %p510 = pneg %p199
      $region38: #{tpu_custom_call.1} parent=11 // pred_check_branch
        %512 = sbr.rel (%p510) target = $region40
      $region39: #{tpu_custom_call.1} parent=11 // pred_region
        _
      $region40: #{tpu_custom_call.1} parent=11 // pred_fallthru
        _
      // Predicated region
      $region41: #{tpu_custom_call.1} parent=11 // pred_check
        %p513 = pneg %p220
      $region42: #{tpu_custom_call.1} parent=11 // pred_check_branch
        %515 = sbr.rel (%p513) target = $region44
      $region43: #{tpu_custom_call.1} parent=11 // pred_region
        _
      $region44: #{tpu_custom_call.1} parent=11 // pred_fallthru
        _
      // Predicated region
      $region45: #{tpu_custom_call.1} parent=11 // pred_check
        %p516 = pneg %p241
      $region46: #{tpu_custom_call.1} parent=11 // pred_check_branch
        %518 = sbr.rel (%p516) target = $region48
      $region47: #{tpu_custom_call.1} parent=11 // pred_region
        _
      $region48: #{tpu_custom_call.1} parent=11 // pred_fallthru
        _
      // Predicated region
      $region49: #{tpu_custom_call.1} parent=11 // pred_check
        %p519 = pneg %p262
      $region50: #{tpu_custom_call.1} parent=11 // pred_check_branch
        %521 = sbr.rel (%p519) target = $region52
      $region51: #{tpu_custom_call.1} parent=11 // pred_region
        _
      $region52: #{tpu_custom_call.1} parent=11 // pred_fallthru
        _
      // Predicated region
      $region53: #{tpu_custom_call.1} parent=11 // pred_check
        %p522 = pneg %p283
      $region54: #{tpu_custom_call.1} parent=11 // pred_check_branch
        %524 = sbr.rel (%p522) target = $region56
      $region55: #{tpu_custom_call.1} parent=11 // pred_region
        _
      $region56: #{tpu_custom_call.1} parent=11 // pred_fallthru
        _
      // Predicated region
      $region57: #{tpu_custom_call.1} parent=11 // pred_check
        %p525 = pneg %p304
      $region58: #{tpu_custom_call.1} parent=11 // pred_check_branch
        %527 = sbr.rel (%p525) target = $region60
      $region59: #{tpu_custom_call.1} parent=11 // pred_region
        _
      $region60: #{tpu_custom_call.1} parent=11 // pred_fallthru
        _
      // Predicated region
      $region61: #{tpu_custom_call.1} parent=11 // pred_check
        %p528 = pneg %p325
      $region62: #{tpu_custom_call.1} parent=11 // pred_check_branch
        %530 = sbr.rel (%p528) target = $region64
      $region63: #{tpu_custom_call.1} parent=11 // pred_region
        _
      $region64: #{tpu_custom_call.1} parent=11 // pred_fallthru
        _
      // Predicated region
      $region65: #{tpu_custom_call.1} parent=11 // pred_check
        %p531 = pneg %p346
      $region66: #{tpu_custom_call.1} parent=11 // pred_check_branch
        %533 = sbr.rel (%p531) target = $region68
      $region67: #{tpu_custom_call.1} parent=11 // pred_region
        _
      $region68: #{tpu_custom_call.1} parent=11 // pred_fallthru
        _
      // Predicated region
      $region69: #{tpu_custom_call.1} parent=11 // pred_check
        %p534 = pneg %p367
      $region70: #{tpu_custom_call.1} parent=11 // pred_check_branch
        %536 = sbr.rel (%p534) target = $region72
      $region71: #{tpu_custom_call.1} parent=11 // pred_region
        _
      $region72: #{tpu_custom_call.1} parent=11 // pred_fallthru
        _
      // Predicated region
      $region73: #{tpu_custom_call.1} parent=11 // pred_check
        %p537 = pneg %p388
      $region74: #{tpu_custom_call.1} parent=11 // pred_check_branch
        %539 = sbr.rel (%p537) target = $region76
      $region75: #{tpu_custom_call.1} parent=11 // pred_region
        _
      $region76: #{tpu_custom_call.1} parent=11 // pred_fallthru
        _
      // Predicated region
      $region77: #{tpu_custom_call.1} parent=11 // pred_check
        %p540 = pneg %p409
      $region78: #{tpu_custom_call.1} parent=11 // pred_check_branch
        %542 = sbr.rel (%p540) target = $region80
      $region79: #{tpu_custom_call.1} parent=11 // pred_region
        _
      $region80: #{tpu_custom_call.1} parent=11 // pred_fallthru
        _
      // Predicated region
      $region81: #{tpu_custom_call.1} parent=11 // pred_check
        %p543 = pneg %p430
      $region82: #{tpu_custom_call.1} parent=11 // pred_check_branch
        %545 = sbr.rel (%p543) target = $region84
      $region83: #{tpu_custom_call.1} parent=11 // pred_region
        _
      $region84: #{tpu_custom_call.1} parent=11 // pred_fallthru
        _
      // Predicated region
      $region85: #{tpu_custom_call.1} parent=11 // pred_check
        %p546 = pneg %p451
      $region86: #{tpu_custom_call.1} parent=11 // pred_check_branch
        %548 = sbr.rel (%p546) target = $region88
      $region87: #{tpu_custom_call.1} parent=11 // pred_region
        _
      $region88: #{tpu_custom_call.1} parent=11 // pred_fallthru
        _
    $region12: #{tpu_custom_call.1} parent=5 // pred_fallthru
      _
    %p549 = scmp.lt.s32.totalorder %s26, 2
    // Predicated region
    $region89: #{tpu_custom_call.1} parent=5 // pred_check
      %p550 = pneg %p549
    $region90: #{tpu_custom_call.1} parent=5 // pred_check_branch
      %552 = sbr.rel (%p550) target = $region92
    $region91: #{tpu_custom_call.1} parent=5 // pred_region
      // Predicated region
      $region93: #{tpu_custom_call.1} parent=91 // pred_check
        %p553 = pneg %p46
      $region94: #{tpu_custom_call.1} parent=91 // pred_check_branch
        %555 = sbr.rel (%p553) target = $region96
      $region95: #{tpu_custom_call.1} parent=91 // pred_region
        %p556 = scmp.lt.s32.totalorder %s26, 1
        %s557 = scalar_select %p556, %s26, 1
        %s558 = smul.addr %s557, 4
        %s559 = scalar_lea.vmem %s0, %s558
      $region96: #{tpu_custom_call.1} parent=91 // pred_fallthru
        _
    $region92: #{tpu_custom_call.1} parent=5 // pred_fallthru
      _
    %p560 = scmp.le.s32.totalorder 1, %s26
    %p561 = scmp.lt.s32.totalorder %s26, 3
    %p562 = pnand %p560, %p561
    %p563 = pneg %p562
    // Predicated region
    $region97: #{tpu_custom_call.1} parent=5 // pred_check
      _
    $region98: #{tpu_custom_call.1} parent=5 // pred_check_branch
      %565 = sbr.rel (%p562) target = $region100
    $region99: #{tpu_custom_call.1} parent=5 // pred_region
      %s566 = ssub.s32 %s26, 1
      %p567 = scmp.lt.s32.totalorder %s31, 1
      %s568 = scalar_select %p567, %s31, 1
      %s569 = smul.addr %s568, 4
      %s570 = scalar_lea.vmem %s0, %s569
      %p571 = pneg %p52
      %p572 = pneg %p49
      %p573 = pneg %p73
      %p574 = pneg %p70
      %p575 = pneg %p94
      %p576 = pneg %p91
      %p577 = pneg %p115
      %p578 = pneg %p112
      %p579 = pneg %p136
      %p580 = pneg %p133
      %p581 = pneg %p157
      %p582 = pneg %p154
      %p583 = pneg %p178
      %p584 = pneg %p175
      %p585 = pneg %p199
      %p586 = pneg %p196
      %p587 = pneg %p220
      %p588 = pneg %p217
      %p589 = pneg %p241
      %p590 = pneg %p238
      %p591 = pneg %p262
      %p592 = pneg %p259
      %p593 = pneg %p283
      %p594 = pneg %p280
      %p595 = pneg %p304
      %p596 = pneg %p301
      %p597 = pneg %p325
      %p598 = pneg %p322
      %p599 = pneg %p346
      %p600 = pneg %p343
      %p601 = pneg %p367
      %p602 = pneg %p364
      %p603 = pneg %p388
      %p604 = pneg %p385
      %p605 = pneg %p409
      %p606 = pneg %p406
      %p607 = pneg %p430
      %p608 = pneg %p427
      %p609 = pneg %p451
      %p610 = pneg %p448
      %p611 = pneg %p477
      %p612 = pneg %p474
      %p613 = scmp.lt.s32.totalorder %s31, 1
      %s614 = scalar_select %p613, %s31, 1
      %s615 = smul.addr %s614, 2
      %s616 = smul.addr %s615, 8
      %s617 = scalar_lea.vmem %s20, %s616
      %p618 = scmp.lt.s32.totalorder %s31, 1
      %s619 = scalar_select %p618, %s31, 1
      %s620 = smul.addr %s619, 4
      %s621 = scalar_lea.vmem %s0, %s620
      %p622 = scmp.lt.s32.totalorder %s31, 1
      %s623 = scalar_select %p622, %s31, 1
      %s624 = smul.addr %s623, 2
      %s625 = smul.addr %s624, 8
      %s626 = scalar_lea.vmem %s20, %s625
      %v627 = vld [vmem:[%s621] sm:$0xf]
      %v628 = vlaneseq
      %v629 = vand.u32 %v628, 127
      %vm630 = vcmask 1043456
      %v631 = vsel %vm630, %v627, 0.0
      %632 = vadd.xlane.f32.xlu0 %v631
      %v633 = vpop.xlane.xlu0 %632
      %v634 = vrcp.pop 128.0
      %v635 = vmul.f32 %v633, %v634
      %v636 = vld [vmem:[%s1] sm:$0x1]
      %v637 = vmul.f32 %v636, %v635
      %v639 = vlaneseq
      %v640 = vshrl.u32 %v639, 7
      %v641 = vsub.s32 1, %v640
      %v642 = vrot.slane %v635, %v641
      %v644 = vmul.f32 %v636, %v642
      %646 = vrot.lane.b32.xlu0 %v644, 127
      %v647 = vpop.permute.xlu0 %646
      %v649 = vadd.f32 %v637, %v647
      %v650 = vlaneseq
      %v651 = vshrl.u32 %v650, 7
      %v652 = vsub.s32 2, %v651
      %v653 = vrot.slane %v635, %v652
      %v655 = vmul.f32 %v636, %v653
      %657 = vrot.lane.b32.xlu0 %v655, 126
      %v658 = vpop.permute.xlu0 %657
      %v660 = vadd.f32 %v649, %v658
      %v661 = vlaneseq
      %v662 = vshrl.u32 %v661, 7
      %v663 = vsub.s32 3, %v662
      %v664 = vrot.slane %v635, %v663
      %v666 = vmul.f32 %v636, %v664
      %668 = vrot.lane.b32.xlu0 %v666, 125
      %v669 = vpop.permute.xlu0 %668
      %v671 = vadd.f32 %v660, %v669
      %v672 = vmax.f32 %v671, 0.0
      %v673 = vld [vmem:[%s2] sm:$0xf]
      %v675 = vlaneseq
      %v676 = vshrl.u32 %v675, 7
      %v677 = vsub.s32 0, %v676
      %v678 = vrot.slane %v672, %v677
      %v680 = vmul.f32 %v673, %v678
      %v681 = vmul.f32 %v680, 2.0
      %v682 = vsub.f32 0.0, %v681
      %v683 = vmul.f32 %v682, 1.442695
      %v684 = vpow.pop %v683
      %v685 = vadd.f32 %v684, 1.0
      %v686 = vrcp.pop %v685
      %v687 = vmul.f32 1.0, %v686
      %689 = vset.pattern.permute.xlu0 0
      %690 = vperm.xlu0 %689, %v687
      %v691 = vpop.permute.xlu0 %690
      %v693 = vmul.f32 %v691, %v627
      %v694 = vsel %vm630, %v693, 0.0
      %v695 = vrot.slane %v694, 4
      %v696 = vadd.f32 %v694, %v695
      %v697 = vrot.slane %v696, 2
      %v698 = vadd.f32 %v696, %v697
      %v699 = vrot.slane %v698, 1
      %v700 = vadd.f32 %v698, %v699
      %v701 = vrcp.pop 4.0
      %v702 = vmul.f32 %v700, %v701
      %v703 = vsel %vm630, %v693, -inf
      %v704 = vrot.slane %v703, 4
      %v705 = vmax.f32 %v703, %v704
      %v706 = vrot.slane %v705, 2
      %v707 = vmax.f32 %v705, %v706
      %v708 = vrot.slane %v707, 1
      %v709 = vmax.f32 %v707, %v708
      %v710 = vld [vmem:[%s3] sm:$0x3]
      %712 = vset.pattern.permute.xlu0 3
      %713 = vperm.xlu0 %712, %v710
      %v714 = vpop.permute.xlu0 %713
      %v716 = vmul.f32 %v702, %v714
      %717 = vrot.lane.b32.xlu0 %v702, 3
      %v718 = vpop.permute.xlu0 %717
      %vm719 = vcmp.ge.s32.totalorder %v629, 3
      %v720 = vsel %vm719, %v718, 0.0
      %721 = vset.pattern.permute.xlu0 0
      %722 = vperm.xlu0 %721, %v710
      %v723 = vpop.permute.xlu0 %722
      %v725 = vmul.f32 %v720, %v723
      %v726 = vadd.f32 %v716, %v725
      %727 = vrot.lane.b32.xlu0 %v702, 2
      %v728 = vpop.permute.xlu0 %727
      %vm729 = vcmp.ge.s32.totalorder %v629, 2
      %v730 = vsel %vm729, %v728, 0.0
      %731 = vset.pattern.permute.xlu0 1
      %732 = vperm.xlu0 %731, %v710
      %v733 = vpop.permute.xlu0 %732
      %v735 = vmul.f32 %v730, %v733
      %v736 = vadd.f32 %v726, %v735
      %737 = vrot.lane.b32.xlu0 %v702, 1
      %v738 = vpop.permute.xlu0 %737
      %vm739 = vcmp.ge.s32.totalorder %v629, 1
      %v740 = vsel %vm739, %v738, 0.0
      %741 = vset.pattern.permute.xlu0 2
      %742 = vperm.xlu0 %741, %v710
      %v743 = vpop.permute.xlu0 %742
      %v745 = vmul.f32 %v740, %v743
      %v746 = vadd.f32 %v736, %v745
      %747 = vrot.lane.b32.xlu0 %v702, 127
      %v748 = vpop.permute.xlu0 %747
      %vm749 = vcmp.lt.s32.totalorder %v629, 127
      %v750 = vsel %vm749, %v748, 0.0
      %751 = vset.pattern.permute.xlu0 4
      %752 = vperm.xlu0 %751, %v710
      %v753 = vpop.permute.xlu0 %752
      %v755 = vmul.f32 %v750, %v753
      %v756 = vadd.f32 %v746, %v755
      %757 = vrot.lane.b32.xlu0 %v702, 126
      %v758 = vpop.permute.xlu0 %757
      %vm759 = vcmp.lt.s32.totalorder %v629, 126
      %v760 = vsel %vm759, %v758, 0.0
      %761 = vset.pattern.permute.xlu0 5
      %762 = vperm.xlu0 %761, %v710
      %v763 = vpop.permute.xlu0 %762
      %v765 = vmul.f32 %v760, %v763
      %v766 = vadd.f32 %v756, %v765
      %767 = vrot.lane.b32.xlu0 %v702, 125
      %v768 = vpop.permute.xlu0 %767
      %vm769 = vcmp.lt.s32.totalorder %v629, 125
      %v770 = vsel %vm769, %v768, 0.0
      %771 = vset.pattern.permute.xlu0 6
      %772 = vperm.xlu0 %771, %v710
      %v773 = vpop.permute.xlu0 %772
      %v775 = vmul.f32 %v770, %v773
      %v776 = vadd.f32 %v766, %v775
      %v777 = vmul.f32 %v709, %v714
      %778 = vrot.lane.b32.xlu0 %v709, 3
      %v779 = vpop.permute.xlu0 %778
      %v780 = vsel %vm719, %v779, 0.0
      %v781 = vrot.slane %v723, 1
      %v783 = vmul.f32 %v780, %v781
      %v785 = vrot.slane %v783, 7
      %v787 = vadd.f32 %v777, %v785
      %788 = vrot.lane.b32.xlu0 %v709, 2
      %v789 = vpop.permute.xlu0 %788
      %v790 = vsel %vm729, %v789, 0.0
      %v791 = vrot.slane %v733, 1
      %v793 = vmul.f32 %v790, %v791
      %v795 = vrot.slane %v793, 7
      %v797 = vadd.f32 %v787, %v795
      %798 = vrot.lane.b32.xlu0 %v709, 1
      %v799 = vpop.permute.xlu0 %798
      %v800 = vsel %vm739, %v799, 0.0
      %v801 = vrot.slane %v743, 1
      %v803 = vmul.f32 %v800, %v801
      %v805 = vrot.slane %v803, 7
      %v807 = vadd.f32 %v797, %v805
      %808 = vrot.lane.b32.xlu0 %v709, 127
      %v809 = vpop.permute.xlu0 %808
      %v810 = vsel %vm749, %v809, 0.0
      %v811 = vrot.slane %v753, 1
      %v813 = vmul.f32 %v810, %v811
      %v815 = vrot.slane %v813, 7
      %v817 = vadd.f32 %v807, %v815
      %818 = vrot.lane.b32.xlu0 %v709, 126
      %v819 = vpop.permute.xlu0 %818
      %v820 = vsel %vm759, %v819, 0.0
      %v821 = vrot.slane %v763, 1
      %v823 = vmul.f32 %v820, %v821
      %v825 = vrot.slane %v823, 7
      %v827 = vadd.f32 %v817, %v825
      %828 = vrot.lane.b32.xlu0 %v709, 125
      %v829 = vpop.permute.xlu0 %828
      %v830 = vsel %vm769, %v829, 0.0
      %v831 = vrot.slane %v773, 1
      %v833 = vmul.f32 %v830, %v831
      %v835 = vrot.slane %v833, 7
      %v837 = vadd.f32 %v827, %v835
      %v839 = vrot.slane %v837, 1
      %v841 = vadd.f32 %v776, %v839
      %v842 = vsub.f32 0.0, %v841
      %v843 = vmul.f32 %v842, 1.442695
      %v844 = vpow.pop %v843
      %v845 = vadd.f32 %v844, 1.0
      %v846 = vrcp.pop %v845
      %v847 = vmul.f32 1.0, %v846
      %v848 = vlaneseq
      %v849 = vshrl.u32 %v848, 7
      %v850 = vsub.s32 0, %v849
      %v851 = vrot.slane %v847, %v850
      %v852 = vmul.f32 %v851, %v693
      %v853 = vld [vmem:[%s4] sm:$0xff]
      %v854 = vld [vmem:[%s4 + $0x8] sm:$0xff]
      %v855 = vld [vmem:[%s4 + $0x10] sm:$0xff]
      %v856 = vld [vmem:[%s19] sm:$0xff]
      %v857 = vld [vmem:[%s19 + $0x8] sm:$0xf]
      %859 = vset.pattern.permute.xlu0 0
      %860 = vperm.xlu0 %859, %v853
      %v861 = vpop.permute.xlu0 %860
      %864 = vset.pattern.permute.xlu0 0
      %865 = vperm.xlu0 %864, %v854
      %v866 = vpop.permute.xlu0 %865
      %869 = vset.pattern.permute.xlu0 0
      %870 = vperm.xlu0 %869, %v855
      %v871 = vpop.permute.xlu0 %870
      %v873 = vlaneseq
      %v874 = vshrl.u32 %v873, 7
      %v875 = vsub.s32 0, %v874
      %v876 = vrot.slane %v852, %v875
      %v877 = vmul.f32 %v861, %v876
      %v878 = vmul.f32 %v866, %v876
      %v879 = vmul.f32 %v871, %v876
      %881 = vset.pattern.permute.xlu0 0
      %882 = vperm.xlu0 %881, %v856
      %v883 = vpop.permute.xlu0 %882
      %886 = vset.pattern.permute.xlu0 0
      %887 = vperm.xlu0 %886, %v857
      %v888 = vpop.permute.xlu0 %887
      %v890 = vmul.f32 %v883, %v876
      %v891 = vmul.f32 %v888, %v876
      %892 = vset.pattern.permute.xlu0 1
      %893 = vperm.xlu0 %892, %v853
      %v894 = vpop.permute.xlu0 %893
      %896 = vset.pattern.permute.xlu0 1
      %897 = vperm.xlu0 %896, %v854
      %v898 = vpop.permute.xlu0 %897
      %900 = vset.pattern.permute.xlu0 1
      %901 = vperm.xlu0 %900, %v855
      %v902 = vpop.permute.xlu0 %901
      %v904 = vlaneseq
      %v905 = vshrl.u32 %v904, 7
      %v906 = vsub.s32 1, %v905
      %v907 = vrot.slane %v852, %v906
      %v908 = vmul.f32 %v894, %v907
      %v909 = vmul.f32 %v898, %v907
      %v910 = vmul.f32 %v902, %v907
      %v911 = vadd.f32 %v877, %v908
      %v912 = vadd.f32 %v878, %v909
      %v913 = vadd.f32 %v879, %v910
      %914 = vset.pattern.permute.xlu0 1
      %915 = vperm.xlu0 %914, %v856
      %v916 = vpop.permute.xlu0 %915
      %918 = vset.pattern.permute.xlu0 1
      %919 = vperm.xlu0 %918, %v857
      %v920 = vpop.permute.xlu0 %919
      %v922 = vmul.f32 %v916, %v907
      %v923 = vmul.f32 %v920, %v907
      %v924 = vadd.f32 %v890, %v922
      %v925 = vadd.f32 %v891, %v923
      %926 = vset.pattern.permute.xlu0 2
      %927 = vperm.xlu0 %926, %v853
      %v928 = vpop.permute.xlu0 %927
      %930 = vset.pattern.permute.xlu0 2
      %931 = vperm.xlu0 %930, %v854
      %v932 = vpop.permute.xlu0 %931
      %934 = vset.pattern.permute.xlu0 2
      %935 = vperm.xlu0 %934, %v855
      %v936 = vpop.permute.xlu0 %935
      %v938 = vlaneseq
      %v939 = vshrl.u32 %v938, 7
      %v940 = vsub.s32 2, %v939
      %v941 = vrot.slane %v852, %v940
      %v942 = vmul.f32 %v928, %v941
      %v943 = vmul.f32 %v932, %v941
      %v944 = vmul.f32 %v936, %v941
      %v945 = vadd.f32 %v911, %v942
      %v946 = vadd.f32 %v912, %v943
      %v947 = vadd.f32 %v913, %v944
      %948 = vset.pattern.permute.xlu0 2
      %949 = vperm.xlu0 %948, %v856
      %v950 = vpop.permute.xlu0 %949
      %952 = vset.pattern.permute.xlu0 2
      %953 = vperm.xlu0 %952, %v857
      %v954 = vpop.permute.xlu0 %953
      %v956 = vmul.f32 %v950, %v941
      %v957 = vmul.f32 %v954, %v941
      %v958 = vadd.f32 %v924, %v956
      %v959 = vadd.f32 %v925, %v957
      %960 = vset.pattern.permute.xlu0 3
      %961 = vperm.xlu0 %960, %v853
      %v962 = vpop.permute.xlu0 %961
      %964 = vset.pattern.permute.xlu0 3
      %965 = vperm.xlu0 %964, %v854
      %v966 = vpop.permute.xlu0 %965
      %968 = vset.pattern.permute.xlu0 3
      %969 = vperm.xlu0 %968, %v855
      %v970 = vpop.permute.xlu0 %969
      %v972 = vlaneseq
      %v973 = vshrl.u32 %v972, 7
      %v974 = vsub.s32 3, %v973
      %v975 = vrot.slane %v852, %v974
      %v976 = vmul.f32 %v962, %v975
      %v977 = vmul.f32 %v966, %v975
      %v978 = vmul.f32 %v970, %v975
      %v979 = vadd.f32 %v945, %v976
      %v980 = vadd.f32 %v946, %v977
      %v981 = vadd.f32 %v947, %v978
      %982 = vset.pattern.permute.xlu0 3
      %983 = vperm.xlu0 %982, %v856
      %v984 = vpop.permute.xlu0 %983
      %986 = vset.pattern.permute.xlu0 3
      %987 = vperm.xlu0 %986, %v857
      %v988 = vpop.permute.xlu0 %987
      %v990 = vmul.f32 %v984, %v975
      %v991 = vmul.f32 %v988, %v975
      %v992 = vadd.f32 %v958, %v990
      %v993 = vadd.f32 %v959, %v991
      %v994 = vld [vmem:[%s5] sm:$0xff]
      %v995 = vld [vmem:[%s5 + $0x8] sm:$0xff]
      %v996 = vld [vmem:[%s5 + $0x10] sm:$0xff]
      %v997 = vld [vmem:[%s6] sm:$0xff]
      %v998 = vld [vmem:[%s6 + $0x8] sm:$0xff]
      %v999 = vld [vmem:[%s6 + $0x10] sm:$0xff]
      %v1000 = vadd.f32 %v979, %v980
      %v1001 = vadd.f32 %v1000, %v981
      %1002 = vadd.xlane.f32.xlu0 %v1001
      %v1003 = vpop.xlane.xlu0 %1002
      %v1004 = vrot.slane %v1003, 4
      %v1005 = vadd.f32 %v1003, %v1004
      %v1006 = vrot.slane %v1005, 2
      %v1007 = vadd.f32 %v1005, %v1006
      %v1008 = vrot.slane %v1007, 1
      %v1009 = vadd.f32 %v1007, %v1008
      %s1010 = vtos %v1009
      %v1011 = vmul.f32 %v979, %v979
      %v1012 = vmul.f32 %v980, %v980
      %v1013 = vmul.f32 %v981, %v981
      %v1014 = vadd.f32 %v1011, %v1012
      %v1015 = vadd.f32 %v1014, %v1013
      %1016 = vadd.xlane.f32.xlu0 %v1015
      %v1017 = vpop.xlane.xlu0 %1016
      %v1018 = vrot.slane %v1017, 4
      %v1019 = vadd.f32 %v1017, %v1018
      %v1020 = vrot.slane %v1019, 2
      %v1021 = vadd.f32 %v1019, %v1020
      %v1022 = vrot.slane %v1021, 1
      %v1023 = vadd.f32 %v1021, %v1022
      %s1024 = vtos %v1023
      %v1025 = vrcp.pop 3072.0
      %s1026 = vtos %v1025
      %s1027 = smul.f32 %s1010, %s1026
      %v1028 = vrcp.pop 3072.0
      %s1029 = vtos %v1028
      %s1030 = smul.f32 %s1024, %s1029
      %s1031 = smul.f32 %s1027, %s1027
      %s1032 = ssub.f32 %s1030, %s1031
      %s1033 = smax.f32 %s1032, 0.0
      %s1034 = sadd.f32 %s1033, 1e-05
      %v1035 = vstv %s1034
      %v1036 = vrsqrt.pop %v1035
      %s1037 = vtos %v1036
      %v1038 = vstv %s1037
      %v1039 = vmul.f32 %v994, %v1038
      %v1040 = vmul.f32 %v995, %v1038
      %v1041 = vmul.f32 %v996, %v1038
      %v1042 = vstv %s1027
      %v1043 = vmul.f32 %v1042, %v1039
      %v1044 = vmul.f32 %v1042, %v1040
      %v1045 = vmul.f32 %v1042, %v1041
      %v1046 = vsub.f32 %v997, %v1043
      %v1047 = vsub.f32 %v998, %v1044
      %v1048 = vsub.f32 %v999, %v1045
      %1050 = vset.pattern.permute.xlu0 0
      %1051 = vperm.xlu0 %1050, %v1039
      %v1052 = vpop.permute.xlu0 %1051
      %1055 = vset.pattern.permute.xlu0 0
      %1056 = vperm.xlu0 %1055, %v1040
      %v1057 = vpop.permute.xlu0 %1056
      %1060 = vset.pattern.permute.xlu0 0
      %1061 = vperm.xlu0 %1060, %v1041
      %v1062 = vpop.permute.xlu0 %1061
      %v1064 = vmul.f32 %v979, %v1052
      %v1065 = vmul.f32 %v980, %v1057
      %v1066 = vmul.f32 %v981, %v1062
      %1068 = vset.pattern.permute.xlu0 0
      %1069 = vperm.xlu0 %1068, %v1046
      %v1070 = vpop.permute.xlu0 %1069
      %1073 = vset.pattern.permute.xlu0 0
      %1074 = vperm.xlu0 %1073, %v1047
      %v1075 = vpop.permute.xlu0 %1074
      %1078 = vset.pattern.permute.xlu0 0
      %1079 = vperm.xlu0 %1078, %v1048
      %v1080 = vpop.permute.xlu0 %1079
      %v1082 = vadd.f32 %v1064, %v1070
      %v1083 = vadd.f32 %v1065, %v1075
      %v1084 = vadd.f32 %v1066, %v1080
      %v1085 = vmax.f32 %v1082, 0.0
      %v1086 = vmax.f32 %v1083, 0.0
      %v1087 = vmax.f32 %v1084, 0.0
      %v1088 = vmin.f32 %v1085, 6.0
      %v1089 = vmin.f32 %v1086, 6.0
      %v1090 = vmin.f32 %v1087, 6.0
      %v1091 = vld [vmem:[%s7] sm:$0xff]
      %v1092 = vld [vmem:[%s7 + $0x8] sm:$0xff]
      %v1093 = vld [vmem:[%s7 + $0x10] sm:$0xff]
      %1095 = vset.pattern.permute.xlu0 0
      %1096 = vperm.xlu0 %1095, %v1091
      %v1097 = vpop.permute.xlu0 %1096
      %1100 = vset.pattern.permute.xlu0 0
      %1101 = vperm.xlu0 %1100, %v1092
      %v1102 = vpop.permute.xlu0 %1101
      %1105 = vset.pattern.permute.xlu0 0
      %1106 = vperm.xlu0 %1105, %v1093
      %v1107 = vpop.permute.xlu0 %1106
      %v1109 = vmul.f32 %v1088, %v1097
      %v1110 = vmul.f32 %v1089, %v1102
      %v1111 = vmul.f32 %v1090, %v1107
      %v1112 = vld [vmem:[%s8] sm:$0xff]
      %v1113 = vld [vmem:[%s8 + $0x8] sm:$0xff]
      %v1114 = vld [vmem:[%s8 + $0x10] sm:$0xff]
      %v1115 = vld [vmem:[%s9] sm:$0xff]
      %v1116 = vld [vmem:[%s9 + $0x8] sm:$0xff]
      %v1117 = vld [vmem:[%s9 + $0x10] sm:$0xff]
      %v1118 = vadd.f32 %v1109, %v1110
      %v1119 = vadd.f32 %v1118, %v1111
      %1120 = vadd.xlane.f32.xlu0 %v1119
      %v1121 = vpop.xlane.xlu0 %1120
      %v1122 = vrot.slane %v1121, 4
      %v1123 = vadd.f32 %v1121, %v1122
      %v1124 = vrot.slane %v1123, 2
      %v1125 = vadd.f32 %v1123, %v1124
      %v1126 = vrot.slane %v1125, 1
      %v1127 = vadd.f32 %v1125, %v1126
      %s1128 = vtos %v1127
      %v1129 = vmul.f32 %v1109, %v1109
      %v1130 = vmul.f32 %v1110, %v1110
      %v1131 = vmul.f32 %v1111, %v1111
      %v1132 = vadd.f32 %v1129, %v1130
      %v1133 = vadd.f32 %v1132, %v1131
      %1134 = vadd.xlane.f32.xlu0 %v1133
      %v1135 = vpop.xlane.xlu0 %1134
      %v1136 = vrot.slane %v1135, 4
      %v1137 = vadd.f32 %v1135, %v1136
      %v1138 = vrot.slane %v1137, 2
      %v1139 = vadd.f32 %v1137, %v1138
      %v1140 = vrot.slane %v1139, 1
      %v1141 = vadd.f32 %v1139, %v1140
      %s1142 = vtos %v1141
      %v1143 = vrcp.pop 3072.0
      %s1144 = vtos %v1143
      %s1145 = smul.f32 %s1128, %s1144
      %v1146 = vrcp.pop 3072.0
      %s1147 = vtos %v1146
      %s1148 = smul.f32 %s1142, %s1147
      %s1149 = smul.f32 %s1145, %s1145
      %s1150 = ssub.f32 %s1148, %s1149
      %s1151 = smax.f32 %s1150, 0.0
      %s1152 = sadd.f32 %s1151, 1e-05
      %v1153 = vstv %s1152
      %v1154 = vrsqrt.pop %v1153
      %s1155 = vtos %v1154
      %v1156 = vstv %s1155
      %v1157 = vmul.f32 %v1112, %v1156
      %v1158 = vmul.f32 %v1113, %v1156
      %v1159 = vmul.f32 %v1114, %v1156
      %v1160 = vstv %s1145
      %v1161 = vmul.f32 %v1160, %v1157
      %v1162 = vmul.f32 %v1160, %v1158
      %v1163 = vmul.f32 %v1160, %v1159
      %v1164 = vsub.f32 %v1115, %v1161
      %v1165 = vsub.f32 %v1116, %v1162
      %v1166 = vsub.f32 %v1117, %v1163
      %1168 = vset.pattern.permute.xlu0 0
      %1169 = vperm.xlu0 %1168, %v1157
      %v1170 = vpop.permute.xlu0 %1169
      %1173 = vset.pattern.permute.xlu0 0
      %1174 = vperm.xlu0 %1173, %v1158
      %v1175 = vpop.permute.xlu0 %1174
      %1178 = vset.pattern.permute.xlu0 0
      %1179 = vperm.xlu0 %1178, %v1159
      %v1180 = vpop.permute.xlu0 %1179
      %v1182 = vmul.f32 %v1109, %v1170
      %v1183 = vmul.f32 %v1110, %v1175
      %v1184 = vmul.f32 %v1111, %v1180
      %1186 = vset.pattern.permute.xlu0 0
      %1187 = vperm.xlu0 %1186, %v1164
      %v1188 = vpop.permute.xlu0 %1187
      %1191 = vset.pattern.permute.xlu0 0
      %1192 = vperm.xlu0 %1191, %v1165
      %v1193 = vpop.permute.xlu0 %1192
      %1196 = vset.pattern.permute.xlu0 0
      %1197 = vperm.xlu0 %1196, %v1166
      %v1198 = vpop.permute.xlu0 %1197
      %v1200 = vadd.f32 %v1182, %v1188
      %v1201 = vadd.f32 %v1183, %v1193
      %v1202 = vadd.f32 %v1184, %v1198
      %v1203 = vmax.f32 %v1200, 0.0
      %v1204 = vmax.f32 %v1201, 0.0
      %v1205 = vmax.f32 %v1202, 0.0
      %v1206 = vmin.f32 %v1203, 6.0
      %v1207 = vmin.f32 %v1204, 6.0
      %v1208 = vmin.f32 %v1205, 6.0
      %v1209 = vld [vmem:[%s10] sm:$0xff]
      %v1210 = vld [vmem:[%s10 + $0x8] sm:$0xff]
      %v1211 = vld [vmem:[%s10 + $0x10] sm:$0xff]
      %1213 = vset.pattern.permute.xlu0 1
      %1214 = vperm.xlu0 %1213, %v1209
      %v1215 = vpop.permute.xlu0 %1214
      %1218 = vset.pattern.permute.xlu0 1
      %1219 = vperm.xlu0 %1218, %v1210
      %v1220 = vpop.permute.xlu0 %1219
      %1223 = vset.pattern.permute.xlu0 1
      %1224 = vperm.xlu0 %1223, %v1211
      %v1225 = vpop.permute.xlu0 %1224
      %v1227 = vmul.f32 %v1088, %v1215
      %v1228 = vmul.f32 %v1089, %v1220
      %v1229 = vmul.f32 %v1090, %v1225
      %1230 = vrot.lane.b32.xlu0 %v1088, 1
      %v1231 = vpop.permute.xlu0 %1230
      %1232 = vrot.lane.b32.xlu0 %v1089, 1
      %v1233 = vpop.permute.xlu0 %1232
      %1234 = vrot.lane.b32.xlu0 %v1090, 1
      %v1235 = vpop.permute.xlu0 %1234
      %v1236 = vsel %vm739, 1, 0
      %vm1237 = vcmp.eq.s32.totalorder %v1236, 1
      %v1238 = vsel %vm1237, %v1231, 0.0
      %v1239 = vsel %vm1237, %v1233, 0.0
      %v1240 = vsel %vm1237, %v1235, 0.0
      %1241 = vset.pattern.permute.xlu0 0
      %1242 = vperm.xlu0 %1241, %v1209
      %v1243 = vpop.permute.xlu0 %1242
      %1245 = vset.pattern.permute.xlu0 0
      %1246 = vperm.xlu0 %1245, %v1210
      %v1247 = vpop.permute.xlu0 %1246
      %1249 = vset.pattern.permute.xlu0 0
      %1250 = vperm.xlu0 %1249, %v1211
      %v1251 = vpop.permute.xlu0 %1250
      %v1253 = vmul.f32 %v1238, %v1243
      %v1254 = vmul.f32 %v1239, %v1247
      %v1255 = vmul.f32 %v1240, %v1251
      %v1256 = vadd.f32 %v1227, %v1253
      %v1257 = vadd.f32 %v1228, %v1254
      %v1258 = vadd.f32 %v1229, %v1255
      %1259 = vrot.lane.b32.xlu0 %v1088, 127
      %v1260 = vpop.permute.xlu0 %1259
      %1261 = vrot.lane.b32.xlu0 %v1089, 127
      %v1262 = vpop.permute.xlu0 %1261
      %1263 = vrot.lane.b32.xlu0 %v1090, 127
      %v1264 = vpop.permute.xlu0 %1263
      %v1265 = vsel %vm749, 1, 0
      %vm1266 = vcmp.eq.s32.totalorder %v1265, 1
      %v1267 = vsel %vm1266, %v1260, 0.0
      %v1268 = vsel %vm1266, %v1262, 0.0
      %v1269 = vsel %vm1266, %v1264, 0.0
      %1270 = vset.pattern.permute.xlu0 2
      %1271 = vperm.xlu0 %1270, %v1209
      %v1272 = vpop.permute.xlu0 %1271
      %1274 = vset.pattern.permute.xlu0 2
      %1275 = vperm.xlu0 %1274, %v1210
      %v1276 = vpop.permute.xlu0 %1275
      %1278 = vset.pattern.permute.xlu0 2
      %1279 = vperm.xlu0 %1278, %v1211
      %v1280 = vpop.permute.xlu0 %1279
      %v1282 = vmul.f32 %v1267, %v1272
      %v1283 = vmul.f32 %v1268, %v1276
      %v1284 = vmul.f32 %v1269, %v1280
      %v1285 = vadd.f32 %v1256, %v1282
      %v1286 = vadd.f32 %v1257, %v1283
      %v1287 = vadd.f32 %v1258, %v1284
      %v1288 = vld [vmem:[%s11] sm:$0xff]
      %v1289 = vld [vmem:[%s11 + $0x8] sm:$0xff]
      %v1290 = vld [vmem:[%s11 + $0x10] sm:$0xff]
      %v1291 = vld [vmem:[%s12] sm:$0xff]
      %v1292 = vld [vmem:[%s12 + $0x8] sm:$0xff]
      %v1293 = vld [vmem:[%s12 + $0x10] sm:$0xff]
      %v1294 = vadd.f32 %v1285, %v1286
      %v1295 = vadd.f32 %v1294, %v1287
      %1296 = vadd.xlane.f32.xlu0 %v1295
      %v1297 = vpop.xlane.xlu0 %1296
      %v1298 = vrot.slane %v1297, 4
      %v1299 = vadd.f32 %v1297, %v1298
      %v1300 = vrot.slane %v1299, 2
      %v1301 = vadd.f32 %v1299, %v1300
      %v1302 = vrot.slane %v1301, 1
      %v1303 = vadd.f32 %v1301, %v1302
      %s1304 = vtos %v1303
      %v1305 = vmul.f32 %v1285, %v1285
      %v1306 = vmul.f32 %v1286, %v1286
      %v1307 = vmul.f32 %v1287, %v1287
      %v1308 = vadd.f32 %v1305, %v1306
      %v1309 = vadd.f32 %v1308, %v1307
      %1310 = vadd.xlane.f32.xlu0 %v1309
      %v1311 = vpop.xlane.xlu0 %1310
      %v1312 = vrot.slane %v1311, 4
      %v1313 = vadd.f32 %v1311, %v1312
      %v1314 = vrot.slane %v1313, 2
      %v1315 = vadd.f32 %v1313, %v1314
      %v1316 = vrot.slane %v1315, 1
      %v1317 = vadd.f32 %v1315, %v1316
      %s1318 = vtos %v1317
      %v1319 = vrcp.pop 3072.0
      %s1320 = vtos %v1319
      %s1321 = smul.f32 %s1304, %s1320
      %v1322 = vrcp.pop 3072.0
      %s1323 = vtos %v1322
      %s1324 = smul.f32 %s1318, %s1323
      %s1325 = smul.f32 %s1321, %s1321
      %s1326 = ssub.f32 %s1324, %s1325
      %s1327 = smax.f32 %s1326, 0.0
      %s1328 = sadd.f32 %s1327, 1e-05
      %v1329 = vstv %s1328
      %v1330 = vrsqrt.pop %v1329
      %s1331 = vtos %v1330
      %v1332 = vstv %s1331
      %v1333 = vmul.f32 %v1288, %v1332
      %v1334 = vmul.f32 %v1289, %v1332
      %v1335 = vmul.f32 %v1290, %v1332
      %v1336 = vstv %s1321
      %v1337 = vmul.f32 %v1336, %v1333
      %v1338 = vmul.f32 %v1336, %v1334
      %v1339 = vmul.f32 %v1336, %v1335
      %v1340 = vsub.f32 %v1291, %v1337
      %v1341 = vsub.f32 %v1292, %v1338
      %v1342 = vsub.f32 %v1293, %v1339
      %1344 = vset.pattern.permute.xlu0 0
      %1345 = vperm.xlu0 %1344, %v1333
      %v1346 = vpop.permute.xlu0 %1345
      %1349 = vset.pattern.permute.xlu0 0
      %1350 = vperm.xlu0 %1349, %v1334
      %v1351 = vpop.permute.xlu0 %1350
      %1354 = vset.pattern.permute.xlu0 0
      %1355 = vperm.xlu0 %1354, %v1335
      %v1356 = vpop.permute.xlu0 %1355
      %v1358 = vmul.f32 %v1285, %v1346
      %v1359 = vmul.f32 %v1286, %v1351
      %v1360 = vmul.f32 %v1287, %v1356
      %1362 = vset.pattern.permute.xlu0 0
      %1363 = vperm.xlu0 %1362, %v1340
      %v1364 = vpop.permute.xlu0 %1363
      %1367 = vset.pattern.permute.xlu0 0
      %1368 = vperm.xlu0 %1367, %v1341
      %v1369 = vpop.permute.xlu0 %1368
      %1372 = vset.pattern.permute.xlu0 0
      %1373 = vperm.xlu0 %1372, %v1342
      %v1374 = vpop.permute.xlu0 %1373
      %v1376 = vadd.f32 %v1358, %v1364
      %v1377 = vadd.f32 %v1359, %v1369
      %v1378 = vadd.f32 %v1360, %v1374
      %v1379 = vmax.f32 %v1376, 0.0
      %v1380 = vmax.f32 %v1377, 0.0
      %v1381 = vmax.f32 %v1378, 0.0
      %v1382 = vmin.f32 %v1379, 6.0
      %v1383 = vmin.f32 %v1380, 6.0
      %v1384 = vmin.f32 %v1381, 6.0
      %v1385 = vadd.f32 %v1206, %v1382
      %v1386 = vadd.f32 %v1207, %v1383
      %v1387 = vadd.f32 %v1208, %v1384
      %v1388 = vld [vmem:[%s13] sm:$0xff]
      %v1389 = vld [vmem:[%s13 + $0x8] sm:$0xff]
      %v1390 = vld [vmem:[%s13 + $0x10] sm:$0xff]
      %1392 = vset.pattern.permute.xlu0 2
      %1393 = vperm.xlu0 %1392, %v1388
      %v1394 = vpop.permute.xlu0 %1393
      %1397 = vset.pattern.permute.xlu0 2
      %1398 = vperm.xlu0 %1397, %v1389
      %v1399 = vpop.permute.xlu0 %1398
      %1402 = vset.pattern.permute.xlu0 2
      %1403 = vperm.xlu0 %1402, %v1390
      %v1404 = vpop.permute.xlu0 %1403
      %v1406 = vmul.f32 %v1088, %v1394
      %v1407 = vmul.f32 %v1089, %v1399
      %v1408 = vmul.f32 %v1090, %v1404
      %1409 = vrot.lane.b32.xlu0 %v1088, 2
      %v1410 = vpop.permute.xlu0 %1409
      %1411 = vrot.lane.b32.xlu0 %v1089, 2
      %v1412 = vpop.permute.xlu0 %1411
      %1413 = vrot.lane.b32.xlu0 %v1090, 2
      %v1414 = vpop.permute.xlu0 %1413
      %v1415 = vsel %vm729, 1, 0
      %vm1416 = vcmp.eq.s32.totalorder %v1415, 1
      %v1417 = vsel %vm1416, %v1410, 0.0
      %v1418 = vsel %vm1416, %v1412, 0.0
      %v1419 = vsel %vm1416, %v1414, 0.0
      %1420 = vset.pattern.permute.xlu0 0
      %1421 = vperm.xlu0 %1420, %v1388
      %v1422 = vpop.permute.xlu0 %1421
      %1424 = vset.pattern.permute.xlu0 0
      %1425 = vperm.xlu0 %1424, %v1389
      %v1426 = vpop.permute.xlu0 %1425
      %1428 = vset.pattern.permute.xlu0 0
      %1429 = vperm.xlu0 %1428, %v1390
      %v1430 = vpop.permute.xlu0 %1429
      %v1432 = vmul.f32 %v1417, %v1422
      %v1433 = vmul.f32 %v1418, %v1426
      %v1434 = vmul.f32 %v1419, %v1430
      %v1435 = vadd.f32 %v1406, %v1432
      %v1436 = vadd.f32 %v1407, %v1433
      %v1437 = vadd.f32 %v1408, %v1434
      %1438 = vset.pattern.permute.xlu0 1
      %1439 = vperm.xlu0 %1438, %v1388
      %v1440 = vpop.permute.xlu0 %1439
      %1442 = vset.pattern.permute.xlu0 1
      %1443 = vperm.xlu0 %1442, %v1389
      %v1444 = vpop.permute.xlu0 %1443
      %1446 = vset.pattern.permute.xlu0 1
      %1447 = vperm.xlu0 %1446, %v1390
      %v1448 = vpop.permute.xlu0 %1447
      %v1450 = vmul.f32 %v1238, %v1440
      %v1451 = vmul.f32 %v1239, %v1444
      %v1452 = vmul.f32 %v1240, %v1448
      %v1453 = vadd.f32 %v1435, %v1450
      %v1454 = vadd.f32 %v1436, %v1451
      %v1455 = vadd.f32 %v1437, %v1452
      %1456 = vset.pattern.permute.xlu0 3
      %1457 = vperm.xlu0 %1456, %v1388
      %v1458 = vpop.permute.xlu0 %1457
      %1460 = vset.pattern.permute.xlu0 3
      %1461 = vperm.xlu0 %1460, %v1389
      %v1462 = vpop.permute.xlu0 %1461
      %1464 = vset.pattern.permute.xlu0 3
      %1465 = vperm.xlu0 %1464, %v1390
      %v1466 = vpop.permute.xlu0 %1465
      %v1468 = vmul.f32 %v1267, %v1458
      %v1469 = vmul.f32 %v1268, %v1462
      %v1470 = vmul.f32 %v1269, %v1466
      %v1471 = vadd.f32 %v1453, %v1468
      %v1472 = vadd.f32 %v1454, %v1469
      %v1473 = vadd.f32 %v1455, %v1470
      %1474 = vrot.lane.b32.xlu0 %v1088, 126
      %v1475 = vpop.permute.xlu0 %1474
      %1476 = vrot.lane.b32.xlu0 %v1089, 126
      %v1477 = vpop.permute.xlu0 %1476
      %1478 = vrot.lane.b32.xlu0 %v1090, 126
      %v1479 = vpop.permute.xlu0 %1478
      %v1480 = vsel %vm759, 1, 0
      %vm1481 = vcmp.eq.s32.totalorder %v1480, 1
      %v1482 = vsel %vm1481, %v1475, 0.0
      %v1483 = vsel %vm1481, %v1477, 0.0
      %v1484 = vsel %vm1481, %v1479, 0.0
      %1485 = vset.pattern.permute.xlu0 4
      %1486 = vperm.xlu0 %1485, %v1388
      %v1487 = vpop.permute.xlu0 %1486
      %1489 = vset.pattern.permute.xlu0 4
      %1490 = vperm.xlu0 %1489, %v1389
      %v1491 = vpop.permute.xlu0 %1490
      %1493 = vset.pattern.permute.xlu0 4
      %1494 = vperm.xlu0 %1493, %v1390
      %v1495 = vpop.permute.xlu0 %1494
      %v1497 = vmul.f32 %v1482, %v1487
      %v1498 = vmul.f32 %v1483, %v1491
      %v1499 = vmul.f32 %v1484, %v1495
      %v1500 = vadd.f32 %v1471, %v1497
      %v1501 = vadd.f32 %v1472, %v1498
      %v1502 = vadd.f32 %v1473, %v1499
      %v1503 = vld [vmem:[%s14] sm:$0xff]
      %v1504 = vld [vmem:[%s14 + $0x8] sm:$0xff]
      %v1505 = vld [vmem:[%s14 + $0x10] sm:$0xff]
      %v1506 = vld [vmem:[%s15] sm:$0xff]
      %v1507 = vld [vmem:[%s15 + $0x8] sm:$0xff]
      %v1508 = vld [vmem:[%s15 + $0x10] sm:$0xff]
      %v1509 = vadd.f32 %v1500, %v1501
      %v1510 = vadd.f32 %v1509, %v1502
      %1511 = vadd.xlane.f32.xlu0 %v1510
      %v1512 = vpop.xlane.xlu0 %1511
      %v1513 = vrot.slane %v1512, 4
      %v1514 = vadd.f32 %v1512, %v1513
      %v1515 = vrot.slane %v1514, 2
      %v1516 = vadd.f32 %v1514, %v1515
      %v1517 = vrot.slane %v1516, 1
      %v1518 = vadd.f32 %v1516, %v1517
      %s1519 = vtos %v1518
      %v1520 = vmul.f32 %v1500, %v1500
      %v1521 = vmul.f32 %v1501, %v1501
      %v1522 = vmul.f32 %v1502, %v1502
      %v1523 = vadd.f32 %v1520, %v1521
      %v1524 = vadd.f32 %v1523, %v1522
      %1525 = vadd.xlane.f32.xlu0 %v1524
      %v1526 = vpop.xlane.xlu0 %1525
      %v1527 = vrot.slane %v1526, 4
      %v1528 = vadd.f32 %v1526, %v1527
      %v1529 = vrot.slane %v1528, 2
      %v1530 = vadd.f32 %v1528, %v1529
      %v1531 = vrot.slane %v1530, 1
      %v1532 = vadd.f32 %v1530, %v1531
      %s1533 = vtos %v1532
      %v1534 = vrcp.pop 3072.0
      %s1535 = vtos %v1534
      %s1536 = smul.f32 %s1519, %s1535
      %v1537 = vrcp.pop 3072.0
      %s1538 = vtos %v1537
      %s1539 = smul.f32 %s1533, %s1538
      %s1540 = smul.f32 %s1536, %s1536
      %s1541 = ssub.f32 %s1539, %s1540
      %s1542 = smax.f32 %s1541, 0.0
      %s1543 = sadd.f32 %s1542, 1e-05
      %v1544 = vstv %s1543
      %v1545 = vrsqrt.pop %v1544
      %s1546 = vtos %v1545
      %v1547 = vstv %s1546
      %v1548 = vmul.f32 %v1503, %v1547
      %v1549 = vmul.f32 %v1504, %v1547
      %v1550 = vmul.f32 %v1505, %v1547
      %v1551 = vstv %s1536
      %v1552 = vmul.f32 %v1551, %v1548
      %v1553 = vmul.f32 %v1551, %v1549
      %v1554 = vmul.f32 %v1551, %v1550
      %v1555 = vsub.f32 %v1506, %v1552
      %v1556 = vsub.f32 %v1507, %v1553
      %v1557 = vsub.f32 %v1508, %v1554
      %1559 = vset.pattern.permute.xlu0 0
      %1560 = vperm.xlu0 %1559, %v1548
      %v1561 = vpop.permute.xlu0 %1560
      %1564 = vset.pattern.permute.xlu0 0
      %1565 = vperm.xlu0 %1564, %v1549
      %v1566 = vpop.permute.xlu0 %1565
      %1569 = vset.pattern.permute.xlu0 0
      %1570 = vperm.xlu0 %1569, %v1550
      %v1571 = vpop.permute.xlu0 %1570
      %v1573 = vmul.f32 %v1500, %v1561
      %v1574 = vmul.f32 %v1501, %v1566
      %v1575 = vmul.f32 %v1502, %v1571
      %1577 = vset.pattern.permute.xlu0 0
      %1578 = vperm.xlu0 %1577, %v1555
      %v1579 = vpop.permute.xlu0 %1578
      %1582 = vset.pattern.permute.xlu0 0
      %1583 = vperm.xlu0 %1582, %v1556
      %v1584 = vpop.permute.xlu0 %1583
      %1587 = vset.pattern.permute.xlu0 0
      %1588 = vperm.xlu0 %1587, %v1557
      %v1589 = vpop.permute.xlu0 %1588
      %v1591 = vadd.f32 %v1573, %v1579
      %v1592 = vadd.f32 %v1574, %v1584
      %v1593 = vadd.f32 %v1575, %v1589
      %v1594 = vmax.f32 %v1591, 0.0
      %v1595 = vmax.f32 %v1592, 0.0
      %v1596 = vmax.f32 %v1593, 0.0
      %v1597 = vmin.f32 %v1594, 6.0
      %v1598 = vmin.f32 %v1595, 6.0
      %v1599 = vmin.f32 %v1596, 6.0
      %v1600 = vadd.f32 %v1385, %v1597
      %v1601 = vadd.f32 %v1386, %v1598
      %v1602 = vadd.f32 %v1387, %v1599
      %v1603 = vld [vmem:[%s16] sm:$0xff]
      %v1604 = vld [vmem:[%s16 + $0x8] sm:$0xf]
      %1606 = vset.pattern.permute.xlu0 0
      %1607 = vperm.xlu0 %1606, %v1603
      %v1608 = vpop.permute.xlu0 %1607
      %1611 = vset.pattern.permute.xlu0 0
      %1612 = vperm.xlu0 %1611, %v1604
      %v1613 = vpop.permute.xlu0 %1612
      %v1615 = vlaneseq
      %v1616 = vshrl.u32 %v1615, 7
      %v1617 = vsub.s32 0, %v1616
      %v1618 = vrot.slane %v1600, %v1617
      %v1619 = vmul.f32 %v1608, %v1618
      %v1620 = vmul.f32 %v1613, %v1618
      %1621 = vset.pattern.permute.xlu0 1
      %1622 = vperm.xlu0 %1621, %v1603
      %v1623 = vpop.permute.xlu0 %1622
      %1625 = vset.pattern.permute.xlu0 1
      %1626 = vperm.xlu0 %1625, %v1604
      %v1627 = vpop.permute.xlu0 %1626
      %v1629 = vlaneseq
      %v1630 = vshrl.u32 %v1629, 7
      %v1631 = vsub.s32 1, %v1630
      %v1632 = vrot.slane %v1600, %v1631
      %v1633 = vmul.f32 %v1623, %v1632
      %v1634 = vmul.f32 %v1627, %v1632
      %v1635 = vadd.f32 %v1619, %v1633
      %v1636 = vadd.f32 %v1620, %v1634
      %1637 = vset.pattern.permute.xlu0 2
      %1638 = vperm.xlu0 %1637, %v1603
      %v1639 = vpop.permute.xlu0 %1638
      %1641 = vset.pattern.permute.xlu0 2
      %1642 = vperm.xlu0 %1641, %v1604
      %v1643 = vpop.permute.xlu0 %1642
      %v1645 = vlaneseq
      %v1646 = vshrl.u32 %v1645, 7
      %v1647 = vsub.s32 2, %v1646
      %v1648 = vrot.slane %v1600, %v1647
      %v1649 = vmul.f32 %v1639, %v1648
      %v1650 = vmul.f32 %v1643, %v1648
      %v1651 = vadd.f32 %v1635, %v1649
      %v1652 = vadd.f32 %v1636, %v1650
      %1653 = vset.pattern.permute.xlu0 3
      %1654 = vperm.xlu0 %1653, %v1603
      %v1655 = vpop.permute.xlu0 %1654
      %1657 = vset.pattern.permute.xlu0 3
      %1658 = vperm.xlu0 %1657, %v1604
      %v1659 = vpop.permute.xlu0 %1658
      %v1661 = vlaneseq
      %v1662 = vshrl.u32 %v1661, 7
      %v1663 = vsub.s32 3, %v1662
      %v1664 = vrot.slane %v1600, %v1663
      %v1665 = vmul.f32 %v1655, %v1664
      %v1666 = vmul.f32 %v1659, %v1664
      %v1667 = vadd.f32 %v1651, %v1665
      %v1668 = vadd.f32 %v1652, %v1666
      %1669 = vset.pattern.permute.xlu0 4
      %1670 = vperm.xlu0 %1669, %v1603
      %v1671 = vpop.permute.xlu0 %1670
      %1673 = vset.pattern.permute.xlu0 4
      %1674 = vperm.xlu0 %1673, %v1604
      %v1675 = vpop.permute.xlu0 %1674
      %v1677 = vlaneseq
      %v1678 = vshrl.u32 %v1677, 7
      %v1679 = vsub.s32 4, %v1678
      %v1680 = vrot.slane %v1600, %v1679
      %v1681 = vmul.f32 %v1671, %v1680
      %v1682 = vmul.f32 %v1675, %v1680
      %v1683 = vadd.f32 %v1667, %v1681
      %v1684 = vadd.f32 %v1668, %v1682
      %1685 = vset.pattern.permute.xlu0 5
      %1686 = vperm.xlu0 %1685, %v1603
      %v1687 = vpop.permute.xlu0 %1686
      %1689 = vset.pattern.permute.xlu0 5
      %1690 = vperm.xlu0 %1689, %v1604
      %v1691 = vpop.permute.xlu0 %1690
      %v1693 = vlaneseq
      %v1694 = vshrl.u32 %v1693, 7
      %v1695 = vsub.s32 5, %v1694
      %v1696 = vrot.slane %v1600, %v1695
      %v1697 = vmul.f32 %v1687, %v1696
      %v1698 = vmul.f32 %v1691, %v1696
      %v1699 = vadd.f32 %v1683, %v1697
      %v1700 = vadd.f32 %v1684, %v1698
      %1701 = vset.pattern.permute.xlu0 6
      %1702 = vperm.xlu0 %1701, %v1603
      %v1703 = vpop.permute.xlu0 %1702
      %1705 = vset.pattern.permute.xlu0 6
      %1706 = vperm.xlu0 %1705, %v1604
      %v1707 = vpop.permute.xlu0 %1706
      %v1709 = vlaneseq
      %v1710 = vshrl.u32 %v1709, 7
      %v1711 = vsub.s32 6, %v1710
      %v1712 = vrot.slane %v1600, %v1711
      %v1713 = vmul.f32 %v1703, %v1712
      %v1714 = vmul.f32 %v1707, %v1712
      %v1715 = vadd.f32 %v1699, %v1713
      %v1716 = vadd.f32 %v1700, %v1714
      %1717 = vset.pattern.permute.xlu0 7
      %1718 = vperm.xlu0 %1717, %v1603
      %v1719 = vpop.permute.xlu0 %1718
      %1721 = vset.pattern.permute.xlu0 7
      %1722 = vperm.xlu0 %1721, %v1604
      %v1723 = vpop.permute.xlu0 %1722
      %v1725 = vlaneseq
      %v1726 = vshrl.u32 %v1725, 7
      %v1727 = vsub.s32 7, %v1726
      %v1728 = vrot.slane %v1600, %v1727
      %v1729 = vmul.f32 %v1719, %v1728
      %v1730 = vmul.f32 %v1723, %v1728
      %v1731 = vadd.f32 %v1715, %v1729
      %v1732 = vadd.f32 %v1716, %v1730
      %1733 = vset.pattern.permute.xlu0 8
      %1734 = vperm.xlu0 %1733, %v1603
      %v1735 = vpop.permute.xlu0 %1734
      %1737 = vset.pattern.permute.xlu0 8
      %1738 = vperm.xlu0 %1737, %v1604
      %v1739 = vpop.permute.xlu0 %1738
      %v1741 = vlaneseq
      %v1742 = vshrl.u32 %v1741, 7
      %v1743 = vsub.s32 0, %v1742
      %v1744 = vrot.slane %v1601, %v1743
      %v1745 = vmul.f32 %v1735, %v1744
      %v1746 = vmul.f32 %v1739, %v1744
      %v1747 = vadd.f32 %v1731, %v1745
      %v1748 = vadd.f32 %v1732, %v1746
      %1749 = vset.pattern.permute.xlu0 9
      %1750 = vperm.xlu0 %1749, %v1603
      %v1751 = vpop.permute.xlu0 %1750
      %1753 = vset.pattern.permute.xlu0 9
      %1754 = vperm.xlu0 %1753, %v1604
      %v1755 = vpop.permute.xlu0 %1754
      %v1757 = vlaneseq
      %v1758 = vshrl.u32 %v1757, 7
      %v1759 = vsub.s32 1, %v1758
      %v1760 = vrot.slane %v1601, %v1759
      %v1761 = vmul.f32 %v1751, %v1760
      %v1762 = vmul.f32 %v1755, %v1760
      %v1763 = vadd.f32 %v1747, %v1761
      %v1764 = vadd.f32 %v1748, %v1762
      %1765 = vset.pattern.permute.xlu0 10
      %1766 = vperm.xlu0 %1765, %v1603
      %v1767 = vpop.permute.xlu0 %1766
      %1769 = vset.pattern.permute.xlu0 10
      %1770 = vperm.xlu0 %1769, %v1604
      %v1771 = vpop.permute.xlu0 %1770
      %v1773 = vlaneseq
      %v1774 = vshrl.u32 %v1773, 7
      %v1775 = vsub.s32 2, %v1774
      %v1776 = vrot.slane %v1601, %v1775
      %v1777 = vmul.f32 %v1767, %v1776
      %v1778 = vmul.f32 %v1771, %v1776
      %v1779 = vadd.f32 %v1763, %v1777
      %v1780 = vadd.f32 %v1764, %v1778
      %1781 = vset.pattern.permute.xlu0 11
      %1782 = vperm.xlu0 %1781, %v1603
      %v1783 = vpop.permute.xlu0 %1782
      %1785 = vset.pattern.permute.xlu0 11
      %1786 = vperm.xlu0 %1785, %v1604
      %v1787 = vpop.permute.xlu0 %1786
      %v1789 = vlaneseq
      %v1790 = vshrl.u32 %v1789, 7
      %v1791 = vsub.s32 3, %v1790
      %v1792 = vrot.slane %v1601, %v1791
      %v1793 = vmul.f32 %v1783, %v1792
      %v1794 = vmul.f32 %v1787, %v1792
      %v1795 = vadd.f32 %v1779, %v1793
      %v1796 = vadd.f32 %v1780, %v1794
      %1797 = vset.pattern.permute.xlu0 12
      %1798 = vperm.xlu0 %1797, %v1603
      %v1799 = vpop.permute.xlu0 %1798
      %1801 = vset.pattern.permute.xlu0 12
      %1802 = vperm.xlu0 %1801, %v1604
      %v1803 = vpop.permute.xlu0 %1802
      %v1805 = vlaneseq
      %v1806 = vshrl.u32 %v1805, 7
      %v1807 = vsub.s32 4, %v1806
      %v1808 = vrot.slane %v1601, %v1807
      %v1809 = vmul.f32 %v1799, %v1808
      %v1810 = vmul.f32 %v1803, %v1808
      %v1811 = vadd.f32 %v1795, %v1809
      %v1812 = vadd.f32 %v1796, %v1810
      %1813 = vset.pattern.permute.xlu0 13
      %1814 = vperm.xlu0 %1813, %v1603
      %v1815 = vpop.permute.xlu0 %1814
      %1817 = vset.pattern.permute.xlu0 13
      %1818 = vperm.xlu0 %1817, %v1604
      %v1819 = vpop.permute.xlu0 %1818
      %v1821 = vlaneseq
      %v1822 = vshrl.u32 %v1821, 7
      %v1823 = vsub.s32 5, %v1822
      %v1824 = vrot.slane %v1601, %v1823
      %v1825 = vmul.f32 %v1815, %v1824
      %v1826 = vmul.f32 %v1819, %v1824
      %v1827 = vadd.f32 %v1811, %v1825
      %v1828 = vadd.f32 %v1812, %v1826
      %1829 = vset.pattern.permute.xlu0 14
      %1830 = vperm.xlu0 %1829, %v1603
      %v1831 = vpop.permute.xlu0 %1830
      %1833 = vset.pattern.permute.xlu0 14
      %1834 = vperm.xlu0 %1833, %v1604
      %v1835 = vpop.permute.xlu0 %1834
      %v1837 = vlaneseq
      %v1838 = vshrl.u32 %v1837, 7
      %v1839 = vsub.s32 6, %v1838
      %v1840 = vrot.slane %v1601, %v1839
      %v1841 = vmul.f32 %v1831, %v1840
      %v1842 = vmul.f32 %v1835, %v1840
      %v1843 = vadd.f32 %v1827, %v1841
      %v1844 = vadd.f32 %v1828, %v1842
      %1845 = vset.pattern.permute.xlu0 15
      %1846 = vperm.xlu0 %1845, %v1603
      %v1847 = vpop.permute.xlu0 %1846
      %1849 = vset.pattern.permute.xlu0 15
      %1850 = vperm.xlu0 %1849, %v1604
      %v1851 = vpop.permute.xlu0 %1850
      %v1853 = vlaneseq
      %v1854 = vshrl.u32 %v1853, 7
      %v1855 = vsub.s32 7, %v1854
      %v1856 = vrot.slane %v1601, %v1855
      %v1857 = vmul.f32 %v1847, %v1856
      %v1858 = vmul.f32 %v1851, %v1856
      %v1859 = vadd.f32 %v1843, %v1857
      %v1860 = vadd.f32 %v1844, %v1858
      %1861 = vset.pattern.permute.xlu0 16
      %1862 = vperm.xlu0 %1861, %v1603
      %v1863 = vpop.permute.xlu0 %1862
      %1865 = vset.pattern.permute.xlu0 16
      %1866 = vperm.xlu0 %1865, %v1604
      %v1867 = vpop.permute.xlu0 %1866
      %v1869 = vlaneseq
      %v1870 = vshrl.u32 %v1869, 7
      %v1871 = vsub.s32 0, %v1870
      %v1872 = vrot.slane %v1602, %v1871
      %v1873 = vmul.f32 %v1863, %v1872
      %v1874 = vmul.f32 %v1867, %v1872
      %v1875 = vadd.f32 %v1859, %v1873
      %v1876 = vadd.f32 %v1860, %v1874
      %1877 = vset.pattern.permute.xlu0 17
      %1878 = vperm.xlu0 %1877, %v1603
      %v1879 = vpop.permute.xlu0 %1878
      %1881 = vset.pattern.permute.xlu0 17
      %1882 = vperm.xlu0 %1881, %v1604
      %v1883 = vpop.permute.xlu0 %1882
      %v1885 = vlaneseq
      %v1886 = vshrl.u32 %v1885, 7
      %v1887 = vsub.s32 1, %v1886
      %v1888 = vrot.slane %v1602, %v1887
      %v1889 = vmul.f32 %v1879, %v1888
      %v1890 = vmul.f32 %v1883, %v1888
      %v1891 = vadd.f32 %v1875, %v1889
      %v1892 = vadd.f32 %v1876, %v1890
      %1893 = vset.pattern.permute.xlu0 18
      %1894 = vperm.xlu0 %1893, %v1603
      %v1895 = vpop.permute.xlu0 %1894
      %1897 = vset.pattern.permute.xlu0 18
      %1898 = vperm.xlu0 %1897, %v1604
      %v1899 = vpop.permute.xlu0 %1898
      %v1901 = vlaneseq
      %v1902 = vshrl.u32 %v1901, 7
      %v1903 = vsub.s32 2, %v1902
      %v1904 = vrot.slane %v1602, %v1903
      %v1905 = vmul.f32 %v1895, %v1904
      %v1906 = vmul.f32 %v1899, %v1904
      %v1907 = vadd.f32 %v1891, %v1905
      %v1908 = vadd.f32 %v1892, %v1906
      %1909 = vset.pattern.permute.xlu0 19
      %1910 = vperm.xlu0 %1909, %v1603
      %v1911 = vpop.permute.xlu0 %1910
      %1913 = vset.pattern.permute.xlu0 19
      %1914 = vperm.xlu0 %1913, %v1604
      %v1915 = vpop.permute.xlu0 %1914
      %v1917 = vlaneseq
      %v1918 = vshrl.u32 %v1917, 7
      %v1919 = vsub.s32 3, %v1918
      %v1920 = vrot.slane %v1602, %v1919
      %v1921 = vmul.f32 %v1911, %v1920
      %v1922 = vmul.f32 %v1915, %v1920
      %v1923 = vadd.f32 %v1907, %v1921
      %v1924 = vadd.f32 %v1908, %v1922
      %1925 = vset.pattern.permute.xlu0 20
      %1926 = vperm.xlu0 %1925, %v1603
      %v1927 = vpop.permute.xlu0 %1926
      %1929 = vset.pattern.permute.xlu0 20
      %1930 = vperm.xlu0 %1929, %v1604
      %v1931 = vpop.permute.xlu0 %1930
      %v1933 = vlaneseq
      %v1934 = vshrl.u32 %v1933, 7
      %v1935 = vsub.s32 4, %v1934
      %v1936 = vrot.slane %v1602, %v1935
      %v1937 = vmul.f32 %v1927, %v1936
      %v1938 = vmul.f32 %v1931, %v1936
      %v1939 = vadd.f32 %v1923, %v1937
      %v1940 = vadd.f32 %v1924, %v1938
      %1941 = vset.pattern.permute.xlu0 21
      %1942 = vperm.xlu0 %1941, %v1603
      %v1943 = vpop.permute.xlu0 %1942
      %1945 = vset.pattern.permute.xlu0 21
      %1946 = vperm.xlu0 %1945, %v1604
      %v1947 = vpop.permute.xlu0 %1946
      %v1949 = vlaneseq
      %v1950 = vshrl.u32 %v1949, 7
      %v1951 = vsub.s32 5, %v1950
      %v1952 = vrot.slane %v1602, %v1951
      %v1953 = vmul.f32 %v1943, %v1952
      %v1954 = vmul.f32 %v1947, %v1952
      %v1955 = vadd.f32 %v1939, %v1953
      %v1956 = vadd.f32 %v1940, %v1954
      %1957 = vset.pattern.permute.xlu0 22
      %1958 = vperm.xlu0 %1957, %v1603
      %v1959 = vpop.permute.xlu0 %1958
      %1961 = vset.pattern.permute.xlu0 22
      %1962 = vperm.xlu0 %1961, %v1604
      %v1963 = vpop.permute.xlu0 %1962
      %v1965 = vlaneseq
      %v1966 = vshrl.u32 %v1965, 7
      %v1967 = vsub.s32 6, %v1966
      %v1968 = vrot.slane %v1602, %v1967
      %v1969 = vmul.f32 %v1959, %v1968
      %v1970 = vmul.f32 %v1963, %v1968
      %v1971 = vadd.f32 %v1955, %v1969
      %v1972 = vadd.f32 %v1956, %v1970
      %1973 = vset.pattern.permute.xlu0 23
      %1974 = vperm.xlu0 %1973, %v1603
      %v1975 = vpop.permute.xlu0 %1974
      %1977 = vset.pattern.permute.xlu0 23
      %1978 = vperm.xlu0 %1977, %v1604
      %v1979 = vpop.permute.xlu0 %1978
      %v1981 = vlaneseq
      %v1982 = vshrl.u32 %v1981, 7
      %v1983 = vsub.s32 7, %v1982
      %v1984 = vrot.slane %v1602, %v1983
      %v1985 = vmul.f32 %v1975, %v1984
      %v1986 = vmul.f32 %v1979, %v1984
      %v1987 = vadd.f32 %v1971, %v1985
      %v1988 = vadd.f32 %v1972, %v1986
      %v1989 = vld [vmem:[%s17] sm:$0xff]
      %v1990 = vld [vmem:[%s17 + $0x8] sm:$0xf]
      %v1991 = vld [vmem:[%s18] sm:$0xff]
      %v1992 = vld [vmem:[%s18 + $0x8] sm:$0xf]
      %v1993 = vsel %vm630, %v1988, 0.0
      %v1994 = vadd.f32 %v1987, %v1993
      %1995 = vadd.xlane.f32.xlu0 %v1994
      %v1996 = vpop.xlane.xlu0 %1995
      %v1997 = vrot.slane %v1996, 4
      %v1998 = vadd.f32 %v1996, %v1997
      %v1999 = vrot.slane %v1998, 2
      %v2000 = vadd.f32 %v1998, %v1999
      %v2001 = vrot.slane %v2000, 1
      %v2002 = vadd.f32 %v2000, %v2001
      %s2003 = vtos %v2002
      %v2004 = vmul.f32 %v1987, %v1987
      %v2005 = vmul.f32 %v1988, %v1988
      %v2006 = vsel %vm630, %v2005, 0.0
      %v2007 = vadd.f32 %v2004, %v2006
      %2008 = vadd.xlane.f32.xlu0 %v2007
      %v2009 = vpop.xlane.xlu0 %2008
      %v2010 = vrot.slane %v2009, 4
      %v2011 = vadd.f32 %v2009, %v2010
      %v2012 = vrot.slane %v2011, 2
      %v2013 = vadd.f32 %v2011, %v2012
      %v2014 = vrot.slane %v2013, 1
      %v2015 = vadd.f32 %v2013, %v2014
      %s2016 = vtos %v2015
      %v2017 = vrcp.pop 1536.0
      %s2018 = vtos %v2017
      %s2019 = smul.f32 %s2003, %s2018
      %v2020 = vrcp.pop 1536.0
      %s2021 = vtos %v2020
      %s2022 = smul.f32 %s2016, %s2021
      %s2023 = smul.f32 %s2019, %s2019
      %s2024 = ssub.f32 %s2022, %s2023
      %s2025 = smax.f32 %s2024, 0.0
      %s2026 = sadd.f32 %s2025, 1e-05
      %v2027 = vstv %s2026
      %v2028 = vrsqrt.pop %v2027
      %s2029 = vtos %v2028
      %v2030 = vstv %s2029
      %v2031 = vmul.f32 %v1989, %v2030
      %v2032 = vmul.f32 %v1990, %v2030
      %v2033 = vstv %s2019
      %v2034 = vmul.f32 %v2033, %v2031
      %v2035 = vmul.f32 %v2033, %v2032
      %v2036 = vsub.f32 %v1991, %v2034
      %v2037 = vsub.f32 %v1992, %v2035
      %2039 = vset.pattern.permute.xlu0 0
      %2040 = vperm.xlu0 %2039, %v2031
      %v2041 = vpop.permute.xlu0 %2040
      %2044 = vset.pattern.permute.xlu0 0
      %2045 = vperm.xlu0 %2044, %v2032
      %v2046 = vpop.permute.xlu0 %2045
      %v2048 = vmul.f32 %v1987, %v2041
      %v2049 = vmul.f32 %v1988, %v2046
      %2051 = vset.pattern.permute.xlu0 0
      %2052 = vperm.xlu0 %2051, %v2036
      %v2053 = vpop.permute.xlu0 %2052
      %2056 = vset.pattern.permute.xlu0 0
      %2057 = vperm.xlu0 %2056, %v2037
      %v2058 = vpop.permute.xlu0 %2057
      %v2060 = vadd.f32 %v2048, %v2053
      %v2061 = vadd.f32 %v2049, %v2058
      %v2062 = vadd.f32 %v992, %v2060
      %v2063 = vadd.f32 %v993, %v2061
      %2064 = vst [vmem:[%s626] sm:$0xff] %v2062
      %2065 = vst [vmem:[%s626 + $0x8] sm:$0xf] %v2063
      %p2066 = scmp.lt.s32.totalorder %s31, 1
      %s2067 = scalar_select %p2066, %s31, 1
      %s2068 = smul.addr %s2067, 2
      %s2069 = smul.addr %s2068, 8
      %s2070 = scalar_lea.vmem %s20, %s2069
      // Predicated region
      $region101: #{tpu_custom_call.1} parent=99 // pred_check
        %p2071 = pneg %p474
      $region102: #{tpu_custom_call.1} parent=99 // pred_check_branch
        %2073 = sbr.rel (%p2071) target = $region104
      $region103: #{tpu_custom_call.1} parent=99 // pred_region
        _
      $region104: #{tpu_custom_call.1} parent=99 // pred_fallthru
        _
    $region100: #{tpu_custom_call.1} parent=5 // pred_fallthru
      _
    %p2074 = scmp.le.s32.totalorder 2, %s26
    // Predicated region
    $region105: #{tpu_custom_call.1} parent=5 // pred_check
      %p2075 = pneg %p2074
    $region106: #{tpu_custom_call.1} parent=5 // pred_check_branch
      %2077 = sbr.rel (%p2075) target = $region108
    $region107: #{tpu_custom_call.1} parent=5 // pred_region
      %s2078 = ssub.s32 %s26, 2
      // Predicated region
      $region109: #{tpu_custom_call.1} parent=107 // pred_check
        %p2079 = pneg %p480
      $region110: #{tpu_custom_call.1} parent=107 // pred_check_branch
        %2081 = sbr.rel (%p2079) target = $region112
      $region111: #{tpu_custom_call.1} parent=107 // pred_region
        %p2082 = scmp.lt.s32.totalorder %s32, 1
        %s2083 = scalar_select %p2082, %s32, 1
        %s2084 = smul.addr %s2083, 2
        %s2085 = smul.addr %s2084, 8
        %s2086 = scalar_lea.vmem %s20, %s2085
      $region112: #{tpu_custom_call.1} parent=107 // pred_fallthru
        _
    $region108: #{tpu_custom_call.1} parent=5 // pred_fallthru
      _
  $region6: #{tpu_custom_call.1} parent=0 // loop_footer
    %s30 = sadd.s32 1, %s26
  $region7: #{tpu_custom_call.1} parent=0 // loop_footer_branch
    %25 = sbr.rel target = $region3
  $region8: #{tpu_custom_call.1} parent=0 // loop_exit
    _

</llo_original>
